<compile_context>
chip_gen: v7x
topology: tpu7x:2x2x1
jax: 0.10.0
libtpu: 0.0.40
codegen_flags: <defaults>
</compile_context>

<pallas_src>
import functools
import math

import jax
import jax.numpy as jnp
from jax import lax
from jax.experimental import pallas as pl
from jax.experimental.pallas import tpu as pltpu


def _fused_dwconv_kernel(w_ref, b_ref, x_ref, o_ref, pad_ref, *, C, H, W):
    """One batch element: two fused depthwise 3x3 convs over a (C, H, W) slab.

    w_ref  : (18, C, 1, 1) f32 VMEM  -- rows 0..8 = conv1 taps, 9..17 = conv2 taps
    b_ref  : (2,  C, 1, 1) f32 VMEM  -- biases for conv1 / conv2
    x_ref  : (1, C, H, W)  f32 VMEM  -- this batch element's input slab
    o_ref  : (1, C, H, W)  f32 VMEM
    pad_ref: (C, H+2, W+2) f32 VMEM scratch (zero-padded staging buffer)
    """
    x = x_ref[0]                                      # (C, H, W)

    # --- zero-pad input by 1 inside VMEM (no wrapper-side jnp.pad / extra HBM pass) ---
    pad_ref[...] = jnp.zeros_like(pad_ref)
    pad_ref[:, 1:H + 1, 1:W + 1] = x
    xp = pad_ref[...]                                 # (C, H+2, W+2) value snapshot

    # --- conv1: depthwise 3x3, vectorized over channels; bias added once at the end ---
    mid = w_ref[0] * xp[:, 0:H, 0:W]                  # tap (0,0) initializes the acc
    for t in range(1, 9):
        kh, kw = t // 3, t % 3
        mid = mid + w_ref[t] * xp[:, kh:kh + H, kw:kw + W]
    mid = mid + b_ref[0]                              # (C,1,1) broadcast

    # --- conv2: zero-pad conv1's OUTPUT (scratch border ring is still zero) -----------
    pad_ref[:, 1:H + 1, 1:W + 1] = mid
    mp = pad_ref[...]                                 # (C, H+2, W+2)

    out = w_ref[9] * mp[:, 0:H, 0:W]
    for t in range(1, 9):
        kh, kw = t // 3, t % 3
        out = out + w_ref[9 + t] * mp[:, kh:kh + H, kw:kw + W]
    out = out + b_ref[1]

    o_ref[0] = out.astype(o_ref.dtype)


def tune_net_forward(x, w1, b1, w2, b2):
    """x: (N, C, H, W); w1/w2: (C, 1, 3, 3); b1/b2: (C,). Returns (N, C, H, W) f32."""
    N, C, H, W = x.shape
    x = x.astype(jnp.float32)

    # Pack both layers' taps as (18, C, 1, 1): row t = tap (t//3, t%3) across channels.
    wts = jnp.concatenate(
        [w1.reshape(C, 9).T, w2.reshape(C, 9).T], axis=0
    ).astype(jnp.float32)[:, :, None, None]                              # (18, C, 1, 1)
    bias = jnp.stack([b1, b2]).astype(jnp.float32)[:, :, None, None]     # (2, C, 1, 1)

    kernel = functools.partial(_fused_dwconv_kernel, C=C, H=H, W=W)
    return pl.pallas_call(
        kernel,
        out_shape=jax.ShapeDtypeStruct((N, C, H, W), jnp.float32),
        grid=(N,),
        in_specs=[
            pl.BlockSpec((18, C, 1, 1), lambda n: (0, 0, 0, 0)),  # weights (resident)
            pl.BlockSpec((2, C, 1, 1), lambda n: (0, 0, 0, 0)),   # biases  (resident)
            pl.BlockSpec((1, C, H, W), lambda n: (n, 0, 0, 0)),   # per-batch input slab
        ],
        out_specs=pl.BlockSpec((1, C, H, W), lambda n: (n, 0, 0, 0)),
        scratch_shapes=[pltpu.VMEM((C, H + 2, W + 2), jnp.float32)],
        compiler_params=pltpu.CompilerParams(
            dimension_semantics=("parallel",)),       # batch axis -> both TCs on v7x
    )(wts, bias, x)


def _reference(x, w1, b1, w2, b2):
    # Pure-JAX reference: two depthwise convs (feature_group_count=C), NCHW / OIHW.
    def dwconv(y, w, b):
        out = lax.conv_general_dilated(
            y, w, window_strides=(1, 1), padding=((1, 1), (1, 1)),
            dimension_numbers=("NCHW", "OIHW", "NCHW"),
            feature_group_count=y.shape[1])
        return out + b[None, :, None, None]
    return dwconv(dwconv(x, w1, b1), w2, b2)


if __name__ == "__main__":
    N, C, H, W = 2, 3, 16, 16
    key = jax.random.PRNGKey(0)
    k1, k2, k3, k4, k5 = jax.random.split(key, 5)

    # Deterministic init, mirroring PyTorch Conv2d default (uniform +/- 1/sqrt(fan_in)).
    fan_in = 1 * 3 * 3   # groups=3 -> 1 input channel per group
    bound = 1.0 / math.sqrt(fan_in)
    w1 = jax.random.uniform(k1, (C, 1, 3, 3), jnp.float32, -bound, bound)
    b1 = jax.random.uniform(k2, (C,), jnp.float32, -bound, bound)
    w2 = jax.random.uniform(k3, (C, 1, 3, 3), jnp.float32, -bound, bound)
    b2 = jax.random.uniform(k4, (C,), jnp.float32, -bound, bound)
    x = jax.random.normal(k5, (N, C, H, W), jnp.float32)

    out = jax.block_until_ready(tune_net_forward(x, w1, b1, w2, b2))

    ref = _reference(x, w1, b1, w2, b2)
    assert out.shape == (N, C, H, W)
    assert jnp.allclose(out, ref, atol=1e-4, rtol=1e-4)
    print("KERNEL_OK")
</pallas_src>

<mosaic_0001>
module attributes {stable_mosaic.version = 11 : i64} {
  func.func @_fused_dwconv_kernel(%arg0: i32, %arg1: memref<18x3x1x1xf32, #tpu.memory_space<vmem>>, %arg2: memref<2x3x1x1xf32, #tpu.memory_space<vmem>>, %arg3: memref<1x3x16x16xf32, #tpu.memory_space<vmem>>, %arg4: memref<1x3x16x16xf32, #tpu.memory_space<vmem>>, %arg5: memref<3x18x18xf32, #tpu.memory_space<vmem>>) attributes {dimension_semantics = [#tpu.dimension_semantics<parallel>], iteration_bounds = array<i64: 2>, scalar_prefetch = 0 : i64, scratch_operands = 1 : i64, tpu.core_type = #tpu.core_type<tc>, window_params = [{pipeline_mode = #tpu.pipeline_mode<synchronous>, transform_indices = @transform_0, window_bounds = array<i64: 18, 3, 1, 1>}, {pipeline_mode = #tpu.pipeline_mode<synchronous>, transform_indices = @transform_1, window_bounds = array<i64: 2, 3, 1, 1>}, {transform_indices = @transform_2, window_bounds = array<i64: 1, 3, 16, 16>}, {transform_indices = @transform_3, window_bounds = array<i64: 1, 3, 16, 16>}]} {
    %c0 = arith.constant 0 : index
    %c0_0 = arith.constant 0 : index
    %c0_1 = arith.constant 0 : index
    %c0_2 = arith.constant 0 : index
    %0 = vector.load %arg3[%c0, %c0_0, %c0_1, %c0_2] : memref<1x3x16x16xf32, #tpu.memory_space<vmem>>, vector<1x3x16x16xf32>
    %1 = vector.shape_cast %0 : vector<1x3x16x16xf32> to vector<3x16x16xf32>
    %cst = arith.constant 0.000000e+00 : f32
    %2 = vector.broadcast %cst : f32 to vector<3x18x18xf32>
    %c0_3 = arith.constant 0 : index
    %c0_4 = arith.constant 0 : index
    %c0_5 = arith.constant 0 : index
    %3 = vector.load %arg5[%c0_3, %c0_4, %c0_5] : memref<3x18x18xf32, #tpu.memory_space<vmem>>, vector<3x18x18xf32>
    tpu.vector_store %arg5[%c0_3, %c0_4, %c0_5], %2 {strides = array<i32>} : memref<3x18x18xf32, #tpu.memory_space<vmem>>, vector<3x18x18xf32>,
    %c0_6 = arith.constant 0 : index
    %c1 = arith.constant 1 : index
    %c1_7 = arith.constant 1 : index
    %4 = vector.load %arg5[%c0_6, %c1, %c1_7] : memref<3x18x18xf32, #tpu.memory_space<vmem>>, vector<3x16x16xf32>
    tpu.vector_store %arg5[%c0_6, %c1, %c1_7], %1 {strides = array<i32>} : memref<3x18x18xf32, #tpu.memory_space<vmem>>, vector<3x16x16xf32>,
    %c0_8 = arith.constant 0 : index
    %c0_9 = arith.constant 0 : index
    %c0_10 = arith.constant 0 : index
    %5 = vector.load %arg5[%c0_8, %c0_9, %c0_10] : memref<3x18x18xf32, #tpu.memory_space<vmem>>, vector<3x18x18xf32>
    %c0_11 = arith.constant 0 : index
    %c0_12 = arith.constant 0 : index
    %c0_13 = arith.constant 0 : index
    %c0_14 = arith.constant 0 : index
    %6 = vector.load %arg1[%c0_11, %c0_12, %c0_13, %c0_14] : memref<18x3x1x1xf32, #tpu.memory_space<vmem>>, vector<1x3x1x1xf32>
    %7 = vector.shape_cast %6 : vector<1x3x1x1xf32> to vector<3x1x1xf32>
    %8 = vector.extract_strided_slice %5 {offsets = [0, 0, 0], sizes = [3, 16, 16], strides = [1, 1, 1]} : vector<3x18x18xf32> to vector<3x16x16xf32>
    %9 = vector.broadcast %7 : vector<3x1x1xf32> to vector<3x16x16xf32>
    %10 = arith.mulf %9, %8 : vector<3x16x16xf32>
    %c1_15 = arith.constant 1 : index
    %c0_16 = arith.constant 0 : index
    %c0_17 = arith.constant 0 : index
    %c0_18 = arith.constant 0 : index
    %11 = vector.load %arg1[%c1_15, %c0_16, %c0_17, %c0_18] : memref<18x3x1x1xf32, #tpu.memory_space<vmem>>, vector<1x3x1x1xf32>
    %12 = vector.shape_cast %11 : vector<1x3x1x1xf32> to vector<3x1x1xf32>
    %13 = vector.extract_strided_slice %5 {offsets = [0, 0, 1], sizes = [3, 16, 16], strides = [1, 1, 1]} : vector<3x18x18xf32> to vector<3x16x16xf32>
    %14 = vector.broadcast %12 : vector<3x1x1xf32> to vector<3x16x16xf32>
    %15 = arith.mulf %14, %13 : vector<3x16x16xf32>
    %16 = arith.addf %10, %15 : vector<3x16x16xf32>
    %c2 = arith.constant 2 : index
    %c0_19 = arith.constant 0 : index
    %c0_20 = arith.constant 0 : index
    %c0_21 = arith.constant 0 : index
    %17 = vector.load %arg1[%c2, %c0_19, %c0_20, %c0_21] : memref<18x3x1x1xf32, #tpu.memory_space<vmem>>, vector<1x3x1x1xf32>
    %18 = vector.shape_cast %17 : vector<1x3x1x1xf32> to vector<3x1x1xf32>
    %19 = vector.extract_strided_slice %5 {offsets = [0, 0, 2], sizes = [3, 16, 16], strides = [1, 1, 1]} : vector<3x18x18xf32> to vector<3x16x16xf32>
    %20 = vector.broadcast %18 : vector<3x1x1xf32> to vector<3x16x16xf32>
    %21 = arith.mulf %20, %19 : vector<3x16x16xf32>
    %22 = arith.addf %16, %21 : vector<3x16x16xf32>
    %c3 = arith.constant 3 : index
    %c0_22 = arith.constant 0 : index
    %c0_23 = arith.constant 0 : index
    %c0_24 = arith.constant 0 : index
    %23 = vector.load %arg1[%c3, %c0_22, %c0_23, %c0_24] : memref<18x3x1x1xf32, #tpu.memory_space<vmem>>, vector<1x3x1x1xf32>
    %24 = vector.shape_cast %23 : vector<1x3x1x1xf32> to vector<3x1x1xf32>
    %25 = vector.extract_strided_slice %5 {offsets = [0, 1, 0], sizes = [3, 16, 16], strides = [1, 1, 1]} : vector<3x18x18xf32> to vector<3x16x16xf32>
    %26 = vector.broadcast %24 : vector<3x1x1xf32> to vector<3x16x16xf32>
    %27 = arith.mulf %26, %25 : vector<3x16x16xf32>
    %28 = arith.addf %22, %27 : vector<3x16x16xf32>
    %c4 = arith.constant 4 : index
    %c0_25 = arith.constant 0 : index
    %c0_26 = arith.constant 0 : index
    %c0_27 = arith.constant 0 : index
    %29 = vector.load %arg1[%c4, %c0_25, %c0_26, %c0_27] : memref<18x3x1x1xf32, #tpu.memory_space<vmem>>, vector<1x3x1x1xf32>
    %30 = vector.shape_cast %29 : vector<1x3x1x1xf32> to vector<3x1x1xf32>
    %31 = vector.extract_strided_slice %5 {offsets = [0, 1, 1], sizes = [3, 16, 16], strides = [1, 1, 1]} : vector<3x18x18xf32> to vector<3x16x16xf32>
    %32 = vector.broadcast %30 : vector<3x1x1xf32> to vector<3x16x16xf32>
    %33 = arith.mulf %32, %31 : vector<3x16x16xf32>
    %34 = arith.addf %28, %33 : vector<3x16x16xf32>
    %c5 = arith.constant 5 : index
    %c0_28 = arith.constant 0 : index
    %c0_29 = arith.constant 0 : index
    %c0_30 = arith.constant 0 : index
    %35 = vector.load %arg1[%c5, %c0_28, %c0_29, %c0_30] : memref<18x3x1x1xf32, #tpu.memory_space<vmem>>, vector<1x3x1x1xf32>
    %36 = vector.shape_cast %35 : vector<1x3x1x1xf32> to vector<3x1x1xf32>
    %37 = vector.extract_strided_slice %5 {offsets = [0, 1, 2], sizes = [3, 16, 16], strides = [1, 1, 1]} : vector<3x18x18xf32> to vector<3x16x16xf32>
    %38 = vector.broadcast %36 : vector<3x1x1xf32> to vector<3x16x16xf32>
    %39 = arith.mulf %38, %37 : vector<3x16x16xf32>
    %40 = arith.addf %34, %39 : vector<3x16x16xf32>
    %c6 = arith.constant 6 : index
    %c0_31 = arith.constant 0 : index
    %c0_32 = arith.constant 0 : index
    %c0_33 = arith.constant 0 : index
    %41 = vector.load %arg1[%c6, %c0_31, %c0_32, %c0_33] : memref<18x3x1x1xf32, #tpu.memory_space<vmem>>, vector<1x3x1x1xf32>
    %42 = vector.shape_cast %41 : vector<1x3x1x1xf32> to vector<3x1x1xf32>
    %43 = vector.extract_strided_slice %5 {offsets = [0, 2, 0], sizes = [3, 16, 16], strides = [1, 1, 1]} : vector<3x18x18xf32> to vector<3x16x16xf32>
    %44 = vector.broadcast %42 : vector<3x1x1xf32> to vector<3x16x16xf32>
    %45 = arith.mulf %44, %43 : vector<3x16x16xf32>
    %46 = arith.addf %40, %45 : vector<3x16x16xf32>
    %c7 = arith.constant 7 : index
    %c0_34 = arith.constant 0 : index
    %c0_35 = arith.constant 0 : index
    %c0_36 = arith.constant 0 : index
    %47 = vector.load %arg1[%c7, %c0_34, %c0_35, %c0_36] : memref<18x3x1x1xf32, #tpu.memory_space<vmem>>, vector<1x3x1x1xf32>
    %48 = vector.shape_cast %47 : vector<1x3x1x1xf32> to vector<3x1x1xf32>
    %49 = vector.extract_strided_slice %5 {offsets = [0, 2, 1], sizes = [3, 16, 16], strides = [1, 1, 1]} : vector<3x18x18xf32> to vector<3x16x16xf32>
    %50 = vector.broadcast %48 : vector<3x1x1xf32> to vector<3x16x16xf32>
    %51 = arith.mulf %50, %49 : vector<3x16x16xf32>
    %52 = arith.addf %46, %51 : vector<3x16x16xf32>
    %c8 = arith.constant 8 : index
    %c0_37 = arith.constant 0 : index
    %c0_38 = arith.constant 0 : index
    %c0_39 = arith.constant 0 : index
    %53 = vector.load %arg1[%c8, %c0_37, %c0_38, %c0_39] : memref<18x3x1x1xf32, #tpu.memory_space<vmem>>, vector<1x3x1x1xf32>
    %54 = vector.shape_cast %53 : vector<1x3x1x1xf32> to vector<3x1x1xf32>
    %55 = vector.extract_strided_slice %5 {offsets = [0, 2, 2], sizes = [3, 16, 16], strides = [1, 1, 1]} : vector<3x18x18xf32> to vector<3x16x16xf32>
    %56 = vector.broadcast %54 : vector<3x1x1xf32> to vector<3x16x16xf32>
    %57 = arith.mulf %56, %55 : vector<3x16x16xf32>
    %58 = arith.addf %52, %57 : vector<3x16x16xf32>
    %c0_40 = arith.constant 0 : index
    %c0_41 = arith.constant 0 : index
    %c0_42 = arith.constant 0 : index
    %c0_43 = arith.constant 0 : index
    %59 = vector.load %arg2[%c0_40, %c0_41, %c0_42, %c0_43] : memref<2x3x1x1xf32, #tpu.memory_space<vmem>>, vector<1x3x1x1xf32>
    %60 = vector.shape_cast %59 : vector<1x3x1x1xf32> to vector<3x1x1xf32>
    %61 = vector.broadcast %60 : vector<3x1x1xf32> to vector<3x16x16xf32>
    %62 = arith.addf %58, %61 : vector<3x16x16xf32>
    %c0_44 = arith.constant 0 : index
    %c1_45 = arith.constant 1 : index
    %c1_46 = arith.constant 1 : index
    %63 = vector.load %arg5[%c0_44, %c1_45, %c1_46] : memref<3x18x18xf32, #tpu.memory_space<vmem>>, vector<3x16x16xf32>
    tpu.vector_store %arg5[%c0_44, %c1_45, %c1_46], %62 {strides = array<i32>} : memref<3x18x18xf32, #tpu.memory_space<vmem>>, vector<3x16x16xf32>,
    %c0_47 = arith.constant 0 : index
    %c0_48 = arith.constant 0 : index
    %c0_49 = arith.constant 0 : index
    %64 = vector.load %arg5[%c0_47, %c0_48, %c0_49] : memref<3x18x18xf32, #tpu.memory_space<vmem>>, vector<3x18x18xf32>
    %c9 = arith.constant 9 : index
    %c0_50 = arith.constant 0 : index
    %c0_51 = arith.constant 0 : index
    %c0_52 = arith.constant 0 : index
    %65 = vector.load %arg1[%c9, %c0_50, %c0_51, %c0_52] : memref<18x3x1x1xf32, #tpu.memory_space<vmem>>, vector<1x3x1x1xf32>
    %66 = vector.shape_cast %65 : vector<1x3x1x1xf32> to vector<3x1x1xf32>
    %67 = vector.extract_strided_slice %64 {offsets = [0, 0, 0], sizes = [3, 16, 16], strides = [1, 1, 1]} : vector<3x18x18xf32> to vector<3x16x16xf32>
    %68 = vector.broadcast %66 : vector<3x1x1xf32> to vector<3x16x16xf32>
    %69 = arith.mulf %68, %67 : vector<3x16x16xf32>
    %c10 = arith.constant 10 : index
    %c0_53 = arith.constant 0 : index
    %c0_54 = arith.constant 0 : index
    %c0_55 = arith.constant 0 : index
    %70 = vector.load %arg1[%c10, %c0_53, %c0_54, %c0_55] : memref<18x3x1x1xf32, #tpu.memory_space<vmem>>, vector<1x3x1x1xf32>
    %71 = vector.shape_cast %70 : vector<1x3x1x1xf32> to vector<3x1x1xf32>
    %72 = vector.extract_strided_slice %64 {offsets = [0, 0, 1], sizes = [3, 16, 16], strides = [1, 1, 1]} : vector<3x18x18xf32> to vector<3x16x16xf32>
    %73 = vector.broadcast %71 : vector<3x1x1xf32> to vector<3x16x16xf32>
    %74 = arith.mulf %73, %72 : vector<3x16x16xf32>
    %75 = arith.addf %69, %74 : vector<3x16x16xf32>
    %c11 = arith.constant 11 : index
    %c0_56 = arith.constant 0 : index
    %c0_57 = arith.constant 0 : index
    %c0_58 = arith.constant 0 : index
    %76 = vector.load %arg1[%c11, %c0_56, %c0_57, %c0_58] : memref<18x3x1x1xf32, #tpu.memory_space<vmem>>, vector<1x3x1x1xf32>
    %77 = vector.shape_cast %76 : vector<1x3x1x1xf32> to vector<3x1x1xf32>
    %78 = vector.extract_strided_slice %64 {offsets = [0, 0, 2], sizes = [3, 16, 16], strides = [1, 1, 1]} : vector<3x18x18xf32> to vector<3x16x16xf32>
    %79 = vector.broadcast %77 : vector<3x1x1xf32> to vector<3x16x16xf32>
    %80 = arith.mulf %79, %78 : vector<3x16x16xf32>
    %81 = arith.addf %75, %80 : vector<3x16x16xf32>
    %c12 = arith.constant 12 : index
    %c0_59 = arith.constant 0 : index
    %c0_60 = arith.constant 0 : index
    %c0_61 = arith.constant 0 : index
    %82 = vector.load %arg1[%c12, %c0_59, %c0_60, %c0_61] : memref<18x3x1x1xf32, #tpu.memory_space<vmem>>, vector<1x3x1x1xf32>
    %83 = vector.shape_cast %82 : vector<1x3x1x1xf32> to vector<3x1x1xf32>
    %84 = vector.extract_strided_slice %64 {offsets = [0, 1, 0], sizes = [3, 16, 16], strides = [1, 1, 1]} : vector<3x18x18xf32> to vector<3x16x16xf32>
    %85 = vector.broadcast %83 : vector<3x1x1xf32> to vector<3x16x16xf32>
    %86 = arith.mulf %85, %84 : vector<3x16x16xf32>
    %87 = arith.addf %81, %86 : vector<3x16x16xf32>
    %c13 = arith.constant 13 : index
    %c0_62 = arith.constant 0 : index
    %c0_63 = arith.constant 0 : index
    %c0_64 = arith.constant 0 : index
    %88 = vector.load %arg1[%c13, %c0_62, %c0_63, %c0_64] : memref<18x3x1x1xf32, #tpu.memory_space<vmem>>, vector<1x3x1x1xf32>
    %89 = vector.shape_cast %88 : vector<1x3x1x1xf32> to vector<3x1x1xf32>
    %90 = vector.extract_strided_slice %64 {offsets = [0, 1, 1], sizes = [3, 16, 16], strides = [1, 1, 1]} : vector<3x18x18xf32> to vector<3x16x16xf32>
    %91 = vector.broadcast %89 : vector<3x1x1xf32> to vector<3x16x16xf32>
    %92 = arith.mulf %91, %90 : vector<3x16x16xf32>
    %93 = arith.addf %87, %92 : vector<3x16x16xf32>
    %c14 = arith.constant 14 : index
    %c0_65 = arith.constant 0 : index
    %c0_66 = arith.constant 0 : index
    %c0_67 = arith.constant 0 : index
    %94 = vector.load %arg1[%c14, %c0_65, %c0_66, %c0_67] : memref<18x3x1x1xf32, #tpu.memory_space<vmem>>, vector<1x3x1x1xf32>
    %95 = vector.shape_cast %94 : vector<1x3x1x1xf32> to vector<3x1x1xf32>
    %96 = vector.extract_strided_slice %64 {offsets = [0, 1, 2], sizes = [3, 16, 16], strides = [1, 1, 1]} : vector<3x18x18xf32> to vector<3x16x16xf32>
    %97 = vector.broadcast %95 : vector<3x1x1xf32> to vector<3x16x16xf32>
    %98 = arith.mulf %97, %96 : vector<3x16x16xf32>
    %99 = arith.addf %93, %98 : vector<3x16x16xf32>
    %c15 = arith.constant 15 : index
    %c0_68 = arith.constant 0 : index
    %c0_69 = arith.constant 0 : index
    %c0_70 = arith.constant 0 : index
    %100 = vector.load %arg1[%c15, %c0_68, %c0_69, %c0_70] : memref<18x3x1x1xf32, #tpu.memory_space<vmem>>, vector<1x3x1x1xf32>
    %101 = vector.shape_cast %100 : vector<1x3x1x1xf32> to vector<3x1x1xf32>
    %102 = vector.extract_strided_slice %64 {offsets = [0, 2, 0], sizes = [3, 16, 16], strides = [1, 1, 1]} : vector<3x18x18xf32> to vector<3x16x16xf32>
    %103 = vector.broadcast %101 : vector<3x1x1xf32> to vector<3x16x16xf32>
    %104 = arith.mulf %103, %102 : vector<3x16x16xf32>
    %105 = arith.addf %99, %104 : vector<3x16x16xf32>
    %c16 = arith.constant 16 : index
    %c0_71 = arith.constant 0 : index
    %c0_72 = arith.constant 0 : index
    %c0_73 = arith.constant 0 : index
    %106 = vector.load %arg1[%c16, %c0_71, %c0_72, %c0_73] : memref<18x3x1x1xf32, #tpu.memory_space<vmem>>, vector<1x3x1x1xf32>
    %107 = vector.shape_cast %106 : vector<1x3x1x1xf32> to vector<3x1x1xf32>
    %108 = vector.extract_strided_slice %64 {offsets = [0, 2, 1], sizes = [3, 16, 16], strides = [1, 1, 1]} : vector<3x18x18xf32> to vector<3x16x16xf32>
    %109 = vector.broadcast %107 : vector<3x1x1xf32> to vector<3x16x16xf32>
    %110 = arith.mulf %109, %108 : vector<3x16x16xf32>
    %111 = arith.addf %105, %110 : vector<3x16x16xf32>
    %c17 = arith.constant 17 : index
    %c0_74 = arith.constant 0 : index
    %c0_75 = arith.constant 0 : index
    %c0_76 = arith.constant 0 : index
    %112 = vector.load %arg1[%c17, %c0_74, %c0_75, %c0_76] : memref<18x3x1x1xf32, #tpu.memory_space<vmem>>, vector<1x3x1x1xf32>
    %113 = vector.shape_cast %112 : vector<1x3x1x1xf32> to vector<3x1x1xf32>
    %114 = vector.extract_strided_slice %64 {offsets = [0, 2, 2], sizes = [3, 16, 16], strides = [1, 1, 1]} : vector<3x18x18xf32> to vector<3x16x16xf32>
    %115 = vector.broadcast %113 : vector<3x1x1xf32> to vector<3x16x16xf32>
    %116 = arith.mulf %115, %114 : vector<3x16x16xf32>
    %117 = arith.addf %111, %116 : vector<3x16x16xf32>
    %c1_77 = arith.constant 1 : index
    %c0_78 = arith.constant 0 : index
    %c0_79 = arith.constant 0 : index
    %c0_80 = arith.constant 0 : index
    %118 = vector.load %arg2[%c1_77, %c0_78, %c0_79, %c0_80] : memref<2x3x1x1xf32, #tpu.memory_space<vmem>>, vector<1x3x1x1xf32>
    %119 = vector.shape_cast %118 : vector<1x3x1x1xf32> to vector<3x1x1xf32>
    %120 = vector.broadcast %119 : vector<3x1x1xf32> to vector<3x16x16xf32>
    %121 = arith.addf %117, %120 : vector<3x16x16xf32>
    %c0_81 = arith.constant 0 : index
    %c0_82 = arith.constant 0 : index
    %c0_83 = arith.constant 0 : index
    %c0_84 = arith.constant 0 : index
    %122 = vector.load %arg4[%c0_81, %c0_82, %c0_83, %c0_84] : memref<1x3x16x16xf32, #tpu.memory_space<vmem>>, vector<1x3x16x16xf32>
    %123 = vector.shape_cast %122 : vector<1x3x16x16xf32> to vector<3x16x16xf32>
    %124 = vector.shape_cast %121 : vector<3x16x16xf32> to vector<1x3x16x16xf32>
    tpu.vector_store %arg4[%c0_81, %c0_82, %c0_83, %c0_84], %124 {strides = array<i32>} : memref<1x3x16x16xf32, #tpu.memory_space<vmem>>, vector<1x3x16x16xf32>,
    return
  }
  func.func @transform_0(%arg0: i32) -> (i32, i32, i32, i32) {
    %c0_i32 = arith.constant 0 : i32
    %c0_i32_0 = arith.constant 0 : i32
    %c0_i32_1 = arith.constant 0 : i32
    %c0_i32_2 = arith.constant 0 : i32
    %c0_i32_3 = arith.constant 0 : i32
    return %c0_i32, %c0_i32_0, %c0_i32_1, %c0_i32_2 : i32, i32, i32, i32
  }
  func.func @transform_1(%arg0: i32) -> (i32, i32, i32, i32) {
    %c0_i32 = arith.constant 0 : i32
    %c0_i32_0 = arith.constant 0 : i32
    %c0_i32_1 = arith.constant 0 : i32
    %c0_i32_2 = arith.constant 0 : i32
    %c0_i32_3 = arith.constant 0 : i32
    return %c0_i32, %c0_i32_0, %c0_i32_1, %c0_i32_2 : i32, i32, i32, i32
  }
  func.func @transform_2(%arg0: i32) -> (i32, i32, i32, i32) {
    %c0_i32 = arith.constant 0 : i32
    %c0_i32_0 = arith.constant 0 : i32
    %c0_i32_1 = arith.constant 0 : i32
    %c0_i32_2 = arith.constant 0 : i32
    return %arg0, %c0_i32, %c0_i32_0, %c0_i32_1 : i32, i32, i32, i32
  }
  func.func @transform_3(%arg0: i32) -> (i32, i32, i32, i32) {
    %c0_i32 = arith.constant 0 : i32
    %c0_i32_0 = arith.constant 0 : i32
    %c0_i32_1 = arith.constant 0 : i32
    %c0_i32_2 = arith.constant 0 : i32
    return %arg0, %c0_i32, %c0_i32_0, %c0_i32_1 : i32, i32, i32, i32
  }
}

</mosaic_0001>

<llo_original>
// kernel: tpu_custom_call.1
$region0: #{tpu_custom_call.1}
  #allocation0 [shape = 'u32[]', space=smem, size = 0x4, offset = 0x4, fixed_abs, tag = 'smem constant byte address 0x4 - core index']
  #allocation1 [shape = 'u32[144,128]{1,0:T(1,128)}', space=vmem, size = 0x12000, scoped, tag = 'internal scratch']
  #allocation2 [shape = 'f32[3,18,18]{2,1,0:T(8,128)}', space=vmem, size = 0x9000, scoped, tag = 'scratch operand']
  %s0 = inlined_call_operand.vmem [shape: f32[18,3,1,1], index: 0, kind: input, shape index: {}]
  %s1 = inlined_call_operand.vmem [shape: f32[2,3,1,1], index: 1, kind: input, shape index: {}]
  %s2 = inlined_call_operand.hbm [shape: f32[2,3,16,16], index: 2, kind: input, shape index: {}]
  %s3 = inlined_call_operand.hbm [shape: f32[2,3,16,16], index: 3, kind: output, shape index: {}]
  %s4 = sld [smem:[#allocation0]]
  $region49: #{tpu_custom_call.1} parent=0
    _
  %s6 = ssub.s32 1, %s4
  %s7 = scalar_select 0, %s6, %s4
  $region1: #{tpu_custom_call.1} parent=0
    #allocation3 [shape = 'u8[49152]{0}', space=vmem, size = 0xc000, scoped, tag = 'input window, operand 2']
    #allocation4 [shape = 's32[2]{0}', space=sflag, size = 0x8, scoped, tag = 'scoped memory for tpu_custom_call.1']
    #allocation5 [shape = 's32[2]{0}', space=sflag, size = 0x8, scoped, tag = 'scoped memory for tpu_custom_call.1']
    #allocation6 [shape = 'u8[49152]{0}', space=vmem, size = 0xc000, scoped, tag = 'output window, operand 0']
    %8 = vsyncpa [#allocation4], 0
    %s9 = scalar_lea.sflag [#allocation4], 1
    %10 = vsyncpa %s9, 0
    %11 = vsyncpa [#allocation5], 0
    %s12 = scalar_lea.sflag [#allocation5], 1
    %13 = vsyncpa %s12, 0
    loop: start=0, step=1, limit=4
    $region2: #{tpu_custom_call.1} parent=1 // loop_pre_header
      _
    $region3: #{tpu_custom_call.1} parent=1 // loop_header
      %s15 = sphi 0, %s19
      %p16 = scmp.ge.s32.totalorder %s15, 4
      %s23 = sphi 0, %s23
      %s25 = sphi 0, %s23
      %s26 = sphi 0, %s25
      %s40 = sphi 0, %s26
      %s44 = sphi 0, %s44
      %s46 = sphi 0, %s44
      %s47 = sphi 0, %s46
      %s61 = sphi 0, %s47
      %s67 = sphi 0, %s69
      %s70 = sphi 0, %s67
      %s71 = sphi 0, %s70
      %s87 = sphi 0, %s71
      %s93 = sphi 0, %s95
      %s96 = sphi 0, %s93
      %s97 = sphi 0, %s96
      %s113 = sphi 0, %s97
    $region4: #{tpu_custom_call.1} parent=1 // loop_header_branch
      %18 = sbr.rel (%p16) target = $region8
    $region5: #{tpu_custom_call.1} parent=1 // loop_body
      %s20 = ssub.s32 %s15, 1
      %s21 = ssub.s32 %s15, 2
      %s22 = sadd.s32 %s15, 1
      %s24 = sadd.s32 %s23, 1
      %p27 = scmp.eq.s32.totalorder %s15, 1
      %p28 = scmp.ne.s32.totalorder %s23, %s25
      %p29 = scmp.eq.s32.totalorder %s15, 0
      %p30 = por %p28, %p29
      %p31 = scmp.ne.s32.totalorder %s23, %s25
      %p32 = scmp.eq.s32.totalorder %s20, 1
      %p33 = por %p31, %p32
      %p34 = scmp.ne.s32.totalorder %s25, %s26
      %p35 = scmp.eq.s32.totalorder %s20, 0
      %p36 = por %p34, %p35
      %p37 = scmp.ne.s32.totalorder %s25, %s26
      %p38 = scmp.eq.s32.totalorder %s21, 1
      %p39 = por %p37, %p38
      %p41 = scmp.ne.s32.totalorder %s26, %s40
      %p42 = scmp.eq.s32.totalorder %s21, 0
      %p43 = por %p41, %p42
      %s45 = sadd.s32 %s44, 1
      %p48 = scmp.eq.s32.totalorder %s15, 1
      %p49 = scmp.ne.s32.totalorder %s44, %s46
      %p50 = scmp.eq.s32.totalorder %s15, 0
      %p51 = por %p49, %p50
      %p52 = scmp.ne.s32.totalorder %s44, %s46
      %p53 = scmp.eq.s32.totalorder %s20, 1
      %p54 = por %p52, %p53
      %p55 = scmp.ne.s32.totalorder %s46, %s47
      %p56 = scmp.eq.s32.totalorder %s20, 0
      %p57 = por %p55, %p56
      %p58 = scmp.ne.s32.totalorder %s46, %s47
      %p59 = scmp.eq.s32.totalorder %s21, 1
      %p60 = por %p58, %p59
      %p62 = scmp.ne.s32.totalorder %s47, %s61
      %p63 = scmp.eq.s32.totalorder %s21, 0
      %p64 = por %p62, %p63
      %s65 = ssub.s32 %s15, %s22
      %p66 = scmp.eq.s32.totalorder %s65, 0
      %s68 = sadd.s32 %s67, 1
      %s69 = scalar_select %p66, %s67, %s68
      %p72 = pneg %p66
      %p73 = scmp.eq.s32.totalorder %s15, 1
      %p74 = por %p72, %p73
      %p75 = scmp.ne.s32.totalorder %s67, %s70
      %p76 = scmp.eq.s32.totalorder %s15, 0
      %p77 = por %p75, %p76
      %p78 = scmp.ne.s32.totalorder %s67, %s70
      %p79 = scmp.eq.s32.totalorder %s20, 1
      %p80 = por %p78, %p79
      %p81 = scmp.ne.s32.totalorder %s70, %s71
      %p82 = scmp.eq.s32.totalorder %s20, 0
      %p83 = por %p81, %p82
      %p84 = scmp.ne.s32.totalorder %s70, %s71
      %p85 = scmp.eq.s32.totalorder %s21, 1
      %p86 = por %p84, %p85
      %p88 = scmp.ne.s32.totalorder %s71, %s87
      %p89 = scmp.eq.s32.totalorder %s21, 0
      %p90 = por %p88, %p89
      %s91 = ssub.s32 %s15, %s22
      %p92 = scmp.eq.s32.totalorder %s91, 0
      %s94 = sadd.s32 %s93, 1
      %s95 = scalar_select %p92, %s93, %s94
      %p98 = pneg %p92
      %p99 = scmp.eq.s32.totalorder %s15, 1
      %p100 = por %p98, %p99
      %p101 = scmp.ne.s32.totalorder %s93, %s96
      %p102 = scmp.eq.s32.totalorder %s15, 0
      %p103 = por %p101, %p102
      %p104 = scmp.ne.s32.totalorder %s93, %s96
      %p105 = scmp.eq.s32.totalorder %s20, 1
      %p106 = por %p104, %p105
      %p107 = scmp.ne.s32.totalorder %s96, %s97
      %p108 = scmp.eq.s32.totalorder %s20, 0
      %p109 = por %p107, %p108
      %p110 = scmp.ne.s32.totalorder %s96, %s97
      %p111 = scmp.eq.s32.totalorder %s21, 1
      %p112 = por %p110, %p111
      %p114 = scmp.ne.s32.totalorder %s97, %s113
      %p115 = scmp.eq.s32.totalorder %s21, 0
      %p116 = por %p114, %p115
      %p117 = scmp.le.s32.totalorder 1, %s15
      %p118 = scmp.lt.s32.totalorder %s15, 3
      %p119 = pnand %p117, %p118
      %p120 = pneg %p119
      // Predicated region
      $region9: #{tpu_custom_call.1} parent=5 // pred_check
        _
      $region10: #{tpu_custom_call.1} parent=5 // pred_check_branch
        %122 = sbr.rel (%p119) target = $region12
      $region11: #{tpu_custom_call.1} parent=5 // pred_region
        %s123 = ssub.s32 %s15, 1
        // Predicated region
        $region13: #{tpu_custom_call.1} parent=11 // pred_check
          %p124 = pneg %p36
        $region14: #{tpu_custom_call.1} parent=11 // pred_check_branch
          %126 = sbr.rel (%p124) target = $region16
        $region15: #{tpu_custom_call.1} parent=11 // pred_region
          _
        $region16: #{tpu_custom_call.1} parent=11 // pred_fallthru
          _
        // Predicated region
        $region17: #{tpu_custom_call.1} parent=11 // pred_check
          %p127 = pneg %p57
        $region18: #{tpu_custom_call.1} parent=11 // pred_check_branch
          %129 = sbr.rel (%p127) target = $region20
        $region19: #{tpu_custom_call.1} parent=11 // pred_region
          _
        $region20: #{tpu_custom_call.1} parent=11 // pred_fallthru
          _
      $region12: #{tpu_custom_call.1} parent=5 // pred_fallthru
        _
      %p130 = scmp.lt.s32.totalorder %s15, 2
      // Predicated region
      $region21: #{tpu_custom_call.1} parent=5 // pred_check
        %p131 = pneg %p130
      $region22: #{tpu_custom_call.1} parent=5 // pred_check_branch
        %133 = sbr.rel (%p131) target = $region24
      $region23: #{tpu_custom_call.1} parent=5 // pred_region
        // Predicated region
        $region25: #{tpu_custom_call.1} parent=23 // pred_check
          %p134 = pneg %p77
        $region26: #{tpu_custom_call.1} parent=23 // pred_check_branch
          %136 = sbr.rel (%p134) target = $region28
        $region27: #{tpu_custom_call.1} parent=23 // pred_region
          %s137 = sand.u32 %s67, 1
          %s138 = scalar_lea.sflag [#allocation4], %s137
          %s139 = sand.u32 %s67, 1
          %s140 = smul.addr %s139, 48
          %s141 = scalar_lea.vmem [#allocation3], %s140
          %s143 = ssub.s32 768, 768
          %144 = vsyncadd %s138, %s143
          %s145 = smul.addr %s15, 6
          %s146 = smul.addr %s145, 128
          %s147 = scalar_lea.hbm %s2, %s146
          %s148 = sshll.u32 %s141, 4
          %s149 = int_to_ptr.vmem [resolvable:$true] %s148
          %154 = dma.hbm_to_vmem [thread:$0]  %s147, 768, %s149, %s138, 128, 128, 8
        $region28: #{tpu_custom_call.1} parent=23 // pred_fallthru
          _
      $region24: #{tpu_custom_call.1} parent=5 // pred_fallthru
        _
      %p155 = scmp.le.s32.totalorder 1, %s15
      %p156 = scmp.lt.s32.totalorder %s15, 3
      %p157 = pnand %p155, %p156
      %p158 = pneg %p157
      // Predicated region
      $region29: #{tpu_custom_call.1} parent=5 // pred_check
        _
      $region30: #{tpu_custom_call.1} parent=5 // pred_check_branch
        %160 = sbr.rel (%p157) target = $region32
      $region31: #{tpu_custom_call.1} parent=5 // pred_region
        %s161 = ssub.s32 %s15, 1
        %s162 = sand.u32 %s70, 1
        %s163 = scalar_lea.sflag [#allocation4], %s162
        %s164 = sand.u32 %s70, 1
        %s165 = smul.addr %s164, 48
        %s166 = scalar_lea.vmem [#allocation3], %s165
        // Predicated region
        $region33: #{tpu_custom_call.1} parent=31 // pred_check
          %p167 = pneg %p83
        $region34: #{tpu_custom_call.1} parent=31 // pred_check_branch
          %169 = sbr.rel (%p167) target = $region36
        $region35: #{tpu_custom_call.1} parent=31 // pred_region
          %170 = dma.done %s163, 768
        $region36: #{tpu_custom_call.1} parent=31 // pred_fallthru
          _
        %p171 = pneg %p36
        %p172 = pneg %p33
        %p173 = pneg %p57
        %p174 = pneg %p54
        %s175 = sand.u32 %s70, 1
        %s176 = scalar_lea.sflag [#allocation4], %s175
        %s177 = sand.u32 %s70, 1
        %s178 = smul.addr %s177, 48
        %s179 = scalar_lea.vmem [#allocation3], %s178
        %p180 = pneg %p83
        %p181 = pneg %p80
        %p182 = pneg %p109
        %p183 = pneg %p106
        %s184 = sand.u32 %s96, 1
        %s185 = scalar_lea.sflag [#allocation5], %s184
        %s186 = sand.u32 %s96, 1
        %s187 = smul.addr %s186, 48
        %s188 = scalar_lea.vmem [#allocation6], %s187
        %v189 = vld [vmem:[%s166] sm:$0xff]
        %v190 = vld [vmem:[%s166 + $0x8] sm:$0xff]
        %v191 = vld [vmem:[%s166 + $0x10] sm:$0xff]
        %v192 = vld [vmem:[%s166 + $0x18] sm:$0xff]
        %v193 = vld [vmem:[%s166 + $0x20] sm:$0xff]
        %v194 = vld [vmem:[%s166 + $0x28] sm:$0xff]
        %vm195 = vcmask 146432
        %196 = vst.msk [vmem:[#allocation2] sm:$0xff] %vm195, 0.0
        %197 = vst.msk [vmem:[#allocation2 + $0x8] sm:$0xff] %vm195, 0.0
        %vm198 = vcmask 140288
        %199 = vst.msk [vmem:[#allocation2 + $0x10] sm:$0x3] %vm198, 0.0
        %200 = vst.msk [vmem:[#allocation2 + $0x18] sm:$0xff] %vm195, 0.0
        %201 = vst.msk [vmem:[#allocation2 + $0x20] sm:$0xff] %vm195, 0.0
        %202 = vst.msk [vmem:[#allocation2 + $0x28] sm:$0x3] %vm198, 0.0
        %203 = vst.msk [vmem:[#allocation2 + $0x30] sm:$0xff] %vm195, 0.0
        %204 = vst.msk [vmem:[#allocation2 + $0x38] sm:$0xff] %vm195, 0.0
        %205 = vst.msk [vmem:[#allocation2 + $0x40] sm:$0x3] %vm198, 0.0
        %212 = vrot.lane.b32.xlu0 %v189, 1
        %v213 = vpop.permute.xlu0 %212
        %214 = vrot.lane.b32.xlu0 %v190, 1
        %v215 = vpop.permute.xlu0 %214
        %216 = vrot.lane.b32.xlu0 %v191, 1
        %v217 = vpop.permute.xlu0 %216
        %218 = vrot.lane.b32.xlu0 %v192, 1
        %v219 = vpop.permute.xlu0 %218
        %220 = vrot.lane.b32.xlu0 %v193, 1
        %v221 = vpop.permute.xlu0 %220
        %222 = vrot.lane.b32.xlu0 %v194, 1
        %v223 = vpop.permute.xlu0 %222
        %vm230 = vcmask 138248
        %231 = vst.msk [vmem:[#allocation2 + $0x1] sm:$0xff] %vm230, %v213
        %232 = vst.msk [vmem:[#allocation2 + $0x9] sm:$0xff] %vm230, %v215
        %233 = vst.msk [vmem:[#allocation2 + $0x19] sm:$0xff] %vm230, %v217
        %234 = vst.msk [vmem:[#allocation2 + $0x21] sm:$0xff] %vm230, %v219
        %235 = vst.msk [vmem:[#allocation2 + $0x31] sm:$0xff] %vm230, %v221
        %236 = vst.msk [vmem:[#allocation2 + $0x39] sm:$0xff] %vm230, %v223
        %v237 = vld [vmem:[#allocation2] sm:$0xff]
        %v238 = vld [vmem:[#allocation2 + $0x8] sm:$0xff]
        %v239 = vld [vmem:[#allocation2 + $0x10] sm:$0x3]
        %v240 = vld [vmem:[#allocation2 + $0x18] sm:$0xff]
        %v241 = vld [vmem:[#allocation2 + $0x20] sm:$0xff]
        %v242 = vld [vmem:[#allocation2 + $0x28] sm:$0x3]
        %v243 = vld [vmem:[#allocation2 + $0x30] sm:$0xff]
        %v244 = vld [vmem:[#allocation2 + $0x38] sm:$0xff]
        %v245 = vld [vmem:[#allocation2 + $0x40] sm:$0x3]
        %v246 = vld [vmem:[%s0] sm:$0x1]
        %v247 = vld [vmem:[%s0 + $0x1] sm:$0x1]
        %v248 = vld [vmem:[%s0 + $0x2] sm:$0x1]
        %v252 = vlaneseq
        %v253 = vshrl.u32 %v252, 7
        %v254 = vsub.s32 0, %v253
        %v255 = vrot.slane %v246, %v254
        %v256 = vlaneseq
        %v257 = vshrl.u32 %v256, 7
        %v258 = vsub.s32 0, %v257
        %v259 = vrot.slane %v247, %v258
        %v260 = vlaneseq
        %v261 = vshrl.u32 %v260, 7
        %v262 = vsub.s32 0, %v261
        %v263 = vrot.slane %v248, %v262
        %264 = vset.pattern.permute.xlu0 0
        %265 = vperm.xlu0 %264, %v255
        %v266 = vpop.permute.xlu0 %265
        %268 = vset.pattern.permute.xlu0 0
        %269 = vperm.xlu0 %268, %v259
        %v270 = vpop.permute.xlu0 %269
        %272 = vset.pattern.permute.xlu0 0
        %273 = vperm.xlu0 %272, %v263
        %v274 = vpop.permute.xlu0 %273
        %v276 = vmul.f32 %v266, %v237
        %v277 = vmul.f32 %v266, %v238
        %v278 = vmul.f32 %v270, %v240
        %v279 = vmul.f32 %v270, %v241
        %v280 = vmul.f32 %v274, %v243
        %v281 = vmul.f32 %v274, %v244
        %s282 = scalar_lea.vmem %s0, 3
        %v283 = vld [vmem:[%s282] sm:$0x1]
        %v284 = vld [vmem:[%s282 + $0x1] sm:$0x1]
        %v285 = vld [vmem:[%s282 + $0x2] sm:$0x1]
        %v289 = vlaneseq
        %v290 = vshrl.u32 %v289, 7
        %v291 = vsub.s32 0, %v290
        %v292 = vrot.slane %v283, %v291
        %v293 = vlaneseq
        %v294 = vshrl.u32 %v293, 7
        %v295 = vsub.s32 0, %v294
        %v296 = vrot.slane %v284, %v295
        %v297 = vlaneseq
        %v298 = vshrl.u32 %v297, 7
        %v299 = vsub.s32 0, %v298
        %v300 = vrot.slane %v285, %v299
        %301 = vset.pattern.permute.xlu0 0
        %302 = vperm.xlu0 %301, %v292
        %v303 = vpop.permute.xlu0 %302
        %305 = vset.pattern.permute.xlu0 0
        %306 = vperm.xlu0 %305, %v296
        %v307 = vpop.permute.xlu0 %306
        %309 = vset.pattern.permute.xlu0 0
        %310 = vperm.xlu0 %309, %v300
        %v311 = vpop.permute.xlu0 %310
        %v313 = vmul.f32 %v303, %v237
        %v314 = vmul.f32 %v303, %v238
        %v315 = vmul.f32 %v307, %v240
        %v316 = vmul.f32 %v307, %v241
        %v317 = vmul.f32 %v311, %v243
        %v318 = vmul.f32 %v311, %v244
        %325 = vrot.lane.b32.xlu0 %v313, 127
        %v326 = vpop.permute.xlu0 %325
        %327 = vrot.lane.b32.xlu0 %v314, 127
        %v328 = vpop.permute.xlu0 %327
        %329 = vrot.lane.b32.xlu0 %v315, 127
        %v330 = vpop.permute.xlu0 %329
        %331 = vrot.lane.b32.xlu0 %v316, 127
        %v332 = vpop.permute.xlu0 %331
        %333 = vrot.lane.b32.xlu0 %v317, 127
        %v334 = vpop.permute.xlu0 %333
        %335 = vrot.lane.b32.xlu0 %v318, 127
        %v336 = vpop.permute.xlu0 %335
        %v343 = vadd.f32 %v276, %v326
        %v344 = vadd.f32 %v277, %v328
        %v345 = vadd.f32 %v278, %v330
        %v346 = vadd.f32 %v279, %v332
        %v347 = vadd.f32 %v280, %v334
        %v348 = vadd.f32 %v281, %v336
        %s349 = scalar_lea.vmem %s0, 6
        %v350 = vld [vmem:[%s349] sm:$0x1]
        %v351 = vld [vmem:[%s349 + $0x1] sm:$0x1]
        %v352 = vld [vmem:[%s349 + $0x2] sm:$0x1]
        %v356 = vlaneseq
        %v357 = vshrl.u32 %v356, 7
        %v358 = vsub.s32 0, %v357
        %v359 = vrot.slane %v350, %v358
        %v360 = vlaneseq
        %v361 = vshrl.u32 %v360, 7
        %v362 = vsub.s32 0, %v361
        %v363 = vrot.slane %v351, %v362
        %v364 = vlaneseq
        %v365 = vshrl.u32 %v364, 7
        %v366 = vsub.s32 0, %v365
        %v367 = vrot.slane %v352, %v366
        %368 = vset.pattern.permute.xlu0 0
        %369 = vperm.xlu0 %368, %v359
        %v370 = vpop.permute.xlu0 %369
        %372 = vset.pattern.permute.xlu0 0
        %373 = vperm.xlu0 %372, %v363
        %v374 = vpop.permute.xlu0 %373
        %376 = vset.pattern.permute.xlu0 0
        %377 = vperm.xlu0 %376, %v367
        %v378 = vpop.permute.xlu0 %377
        %v380 = vmul.f32 %v370, %v237
        %v381 = vmul.f32 %v370, %v238
        %v382 = vmul.f32 %v374, %v240
        %v383 = vmul.f32 %v374, %v241
        %v384 = vmul.f32 %v378, %v243
        %v385 = vmul.f32 %v378, %v244
        %392 = vrot.lane.b32.xlu0 %v380, 126
        %v393 = vpop.permute.xlu0 %392
        %394 = vrot.lane.b32.xlu0 %v381, 126
        %v395 = vpop.permute.xlu0 %394
        %396 = vrot.lane.b32.xlu0 %v382, 126
        %v397 = vpop.permute.xlu0 %396
        %398 = vrot.lane.b32.xlu0 %v383, 126
        %v399 = vpop.permute.xlu0 %398
        %400 = vrot.lane.b32.xlu0 %v384, 126
        %v401 = vpop.permute.xlu0 %400
        %402 = vrot.lane.b32.xlu0 %v385, 126
        %v403 = vpop.permute.xlu0 %402
        %v410 = vadd.f32 %v343, %v393
        %v411 = vadd.f32 %v344, %v395
        %v412 = vadd.f32 %v345, %v397
        %v413 = vadd.f32 %v346, %v399
        %v414 = vadd.f32 %v347, %v401
        %v415 = vadd.f32 %v348, %v403
        %s416 = scalar_lea.vmem %s0, 9
        %v417 = vld [vmem:[%s416] sm:$0x1]
        %v418 = vld [vmem:[%s416 + $0x1] sm:$0x1]
        %v419 = vld [vmem:[%s416 + $0x2] sm:$0x1]
        %v423 = vlaneseq
        %v424 = vshrl.u32 %v423, 7
        %v425 = vsub.s32 0, %v424
        %v426 = vrot.slane %v417, %v425
        %v427 = vlaneseq
        %v428 = vshrl.u32 %v427, 7
        %v429 = vsub.s32 0, %v428
        %v430 = vrot.slane %v418, %v429
        %v431 = vlaneseq
        %v432 = vshrl.u32 %v431, 7
        %v433 = vsub.s32 0, %v432
        %v434 = vrot.slane %v419, %v433
        %435 = vset.pattern.permute.xlu0 0
        %436 = vperm.xlu0 %435, %v426
        %v437 = vpop.permute.xlu0 %436
        %439 = vset.pattern.permute.xlu0 0
        %440 = vperm.xlu0 %439, %v430
        %v441 = vpop.permute.xlu0 %440
        %443 = vset.pattern.permute.xlu0 0
        %444 = vperm.xlu0 %443, %v434
        %v445 = vpop.permute.xlu0 %444
        %v447 = vmul.f32 %v437, %v237
        %v448 = vmul.f32 %v437, %v238
        %v449 = vmul.f32 %v437, %v239
        %v450 = vmul.f32 %v441, %v240
        %v451 = vmul.f32 %v441, %v241
        %v452 = vmul.f32 %v441, %v242
        %v453 = vmul.f32 %v445, %v243
        %v454 = vmul.f32 %v445, %v244
        %v455 = vmul.f32 %v445, %v245
        %vm465 = vcmask 1046528
        %v466 = vrot.slane %v447, 1
        %v467 = vrot.slane %v448, 1
        %v468 = vsel %vm465, %v466, %v467
        %v469 = vrot.slane %v449, 1
        %v470 = vsel %vm465, %v467, %v469
        %v471 = vrot.slane %v450, 1
        %v472 = vrot.slane %v451, 1
        %v473 = vsel %vm465, %v471, %v472
        %v474 = vrot.slane %v452, 1
        %v475 = vsel %vm465, %v472, %v474
        %v476 = vrot.slane %v453, 1
        %v477 = vrot.slane %v454, 1
        %v478 = vsel %vm465, %v476, %v477
        %v479 = vrot.slane %v455, 1
        %v480 = vsel %vm465, %v477, %v479
        %v487 = vadd.f32 %v410, %v468
        %v488 = vadd.f32 %v411, %v470
        %v489 = vadd.f32 %v412, %v473
        %v490 = vadd.f32 %v413, %v475
        %v491 = vadd.f32 %v414, %v478
        %v492 = vadd.f32 %v415, %v480
        %s493 = scalar_lea.vmem %s0, 12
        %v494 = vld [vmem:[%s493] sm:$0x1]
        %v495 = vld [vmem:[%s493 + $0x1] sm:$0x1]
        %v496 = vld [vmem:[%s493 + $0x2] sm:$0x1]
        %v500 = vlaneseq
        %v501 = vshrl.u32 %v500, 7
        %v502 = vsub.s32 0, %v501
        %v503 = vrot.slane %v494, %v502
        %v504 = vlaneseq
        %v505 = vshrl.u32 %v504, 7
        %v506 = vsub.s32 0, %v505
        %v507 = vrot.slane %v495, %v506
        %v508 = vlaneseq
        %v509 = vshrl.u32 %v508, 7
        %v510 = vsub.s32 0, %v509
        %v511 = vrot.slane %v496, %v510
        %512 = vset.pattern.permute.xlu0 0
        %513 = vperm.xlu0 %512, %v503
        %v514 = vpop.permute.xlu0 %513
        %516 = vset.pattern.permute.xlu0 0
        %517 = vperm.xlu0 %516, %v507
        %v518 = vpop.permute.xlu0 %517
        %520 = vset.pattern.permute.xlu0 0
        %521 = vperm.xlu0 %520, %v511
        %v522 = vpop.permute.xlu0 %521
        %v524 = vmul.f32 %v514, %v237
        %v525 = vmul.f32 %v514, %v238
        %v526 = vmul.f32 %v514, %v239
        %v527 = vmul.f32 %v518, %v240
        %v528 = vmul.f32 %v518, %v241
        %v529 = vmul.f32 %v518, %v242
        %v530 = vmul.f32 %v522, %v243
        %v531 = vmul.f32 %v522, %v244
        %v532 = vmul.f32 %v522, %v245
        %v542 = vrot.slane %v524, 1
        %v543 = vrot.slane %v525, 1
        %v544 = vsel %vm465, %v542, %v543
        %v545 = vrot.slane %v526, 1
        %v546 = vsel %vm465, %v543, %v545
        %v547 = vrot.slane %v527, 1
        %v548 = vrot.slane %v528, 1
        %v549 = vsel %vm465, %v547, %v548
        %v550 = vrot.slane %v529, 1
        %v551 = vsel %vm465, %v548, %v550
        %v552 = vrot.slane %v530, 1
        %v553 = vrot.slane %v531, 1
        %v554 = vsel %vm465, %v552, %v553
        %v555 = vrot.slane %v532, 1
        %v556 = vsel %vm465, %v553, %v555
        %557 = vrot.lane.b32.xlu0 %v544, 127
        %v558 = vpop.permute.xlu0 %557
        %559 = vrot.lane.b32.xlu0 %v546, 127
        %v560 = vpop.permute.xlu0 %559
        %561 = vrot.lane.b32.xlu0 %v549, 127
        %v562 = vpop.permute.xlu0 %561
        %563 = vrot.lane.b32.xlu0 %v551, 127
        %v564 = vpop.permute.xlu0 %563
        %565 = vrot.lane.b32.xlu0 %v554, 127
        %v566 = vpop.permute.xlu0 %565
        %567 = vrot.lane.b32.xlu0 %v556, 127
        %v568 = vpop.permute.xlu0 %567
        %v575 = vadd.f32 %v487, %v558
        %v576 = vadd.f32 %v488, %v560
        %v577 = vadd.f32 %v489, %v562
        %v578 = vadd.f32 %v490, %v564
        %v579 = vadd.f32 %v491, %v566
        %v580 = vadd.f32 %v492, %v568
        %s581 = scalar_lea.vmem %s0, 15
        %v582 = vld [vmem:[%s581] sm:$0x1]
        %v583 = vld [vmem:[%s581 + $0x1] sm:$0x1]
        %v584 = vld [vmem:[%s581 + $0x2] sm:$0x1]
        %v588 = vlaneseq
        %v589 = vshrl.u32 %v588, 7
        %v590 = vsub.s32 0, %v589
        %v591 = vrot.slane %v582, %v590
        %v592 = vlaneseq
        %v593 = vshrl.u32 %v592, 7
        %v594 = vsub.s32 0, %v593
        %v595 = vrot.slane %v583, %v594
        %v596 = vlaneseq
        %v597 = vshrl.u32 %v596, 7
        %v598 = vsub.s32 0, %v597
        %v599 = vrot.slane %v584, %v598
        %600 = vset.pattern.permute.xlu0 0
        %601 = vperm.xlu0 %600, %v591
        %v602 = vpop.permute.xlu0 %601
        %604 = vset.pattern.permute.xlu0 0
        %605 = vperm.xlu0 %604, %v595
        %v606 = vpop.permute.xlu0 %605
        %608 = vset.pattern.permute.xlu0 0
        %609 = vperm.xlu0 %608, %v599
        %v610 = vpop.permute.xlu0 %609
        %v612 = vmul.f32 %v602, %v237
        %v613 = vmul.f32 %v602, %v238
        %v614 = vmul.f32 %v602, %v239
        %v615 = vmul.f32 %v606, %v240
        %v616 = vmul.f32 %v606, %v241
        %v617 = vmul.f32 %v606, %v242
        %v618 = vmul.f32 %v610, %v243
        %v619 = vmul.f32 %v610, %v244
        %v620 = vmul.f32 %v610, %v245
        %v630 = vrot.slane %v612, 1
        %v631 = vrot.slane %v613, 1
        %v632 = vsel %vm465, %v630, %v631
        %v633 = vrot.slane %v614, 1
        %v634 = vsel %vm465, %v631, %v633
        %v635 = vrot.slane %v615, 1
        %v636 = vrot.slane %v616, 1
        %v637 = vsel %vm465, %v635, %v636
        %v638 = vrot.slane %v617, 1
        %v639 = vsel %vm465, %v636, %v638
        %v640 = vrot.slane %v618, 1
        %v641 = vrot.slane %v619, 1
        %v642 = vsel %vm465, %v640, %v641
        %v643 = vrot.slane %v620, 1
        %v644 = vsel %vm465, %v641, %v643
        %645 = vrot.lane.b32.xlu0 %v632, 126
        %v646 = vpop.permute.xlu0 %645
        %647 = vrot.lane.b32.xlu0 %v634, 126
        %v648 = vpop.permute.xlu0 %647
        %649 = vrot.lane.b32.xlu0 %v637, 126
        %v650 = vpop.permute.xlu0 %649
        %651 = vrot.lane.b32.xlu0 %v639, 126
        %v652 = vpop.permute.xlu0 %651
        %653 = vrot.lane.b32.xlu0 %v642, 126
        %v654 = vpop.permute.xlu0 %653
        %655 = vrot.lane.b32.xlu0 %v644, 126
        %v656 = vpop.permute.xlu0 %655
        %v663 = vadd.f32 %v575, %v646
        %v664 = vadd.f32 %v576, %v648
        %v665 = vadd.f32 %v577, %v650
        %v666 = vadd.f32 %v578, %v652
        %v667 = vadd.f32 %v579, %v654
        %v668 = vadd.f32 %v580, %v656
        %s669 = scalar_lea.vmem %s0, 18
        %v670 = vld [vmem:[%s669] sm:$0x1]
        %v671 = vld [vmem:[%s669 + $0x1] sm:$0x1]
        %v672 = vld [vmem:[%s669 + $0x2] sm:$0x1]
        %v676 = vlaneseq
        %v677 = vshrl.u32 %v676, 7
        %v678 = vsub.s32 0, %v677
        %v679 = vrot.slane %v670, %v678
        %v680 = vlaneseq
        %v681 = vshrl.u32 %v680, 7
        %v682 = vsub.s32 0, %v681
        %v683 = vrot.slane %v671, %v682
        %v684 = vlaneseq
        %v685 = vshrl.u32 %v684, 7
        %v686 = vsub.s32 0, %v685
        %v687 = vrot.slane %v672, %v686
        %688 = vset.pattern.permute.xlu0 0
        %689 = vperm.xlu0 %688, %v679
        %v690 = vpop.permute.xlu0 %689
        %692 = vset.pattern.permute.xlu0 0
        %693 = vperm.xlu0 %692, %v683
        %v694 = vpop.permute.xlu0 %693
        %696 = vset.pattern.permute.xlu0 0
        %697 = vperm.xlu0 %696, %v687
        %v698 = vpop.permute.xlu0 %697
        %v700 = vmul.f32 %v690, %v237
        %v701 = vmul.f32 %v690, %v238
        %v702 = vmul.f32 %v690, %v239
        %v703 = vmul.f32 %v694, %v240
        %v704 = vmul.f32 %v694, %v241
        %v705 = vmul.f32 %v694, %v242
        %v706 = vmul.f32 %v698, %v243
        %v707 = vmul.f32 %v698, %v244
        %v708 = vmul.f32 %v698, %v245
        %vm718 = vcmask 1045504
        %v719 = vrot.slane %v700, 2
        %v720 = vrot.slane %v701, 2
        %v721 = vsel %vm718, %v719, %v720
        %v722 = vrot.slane %v702, 2
        %v723 = vsel %vm718, %v720, %v722
        %v724 = vrot.slane %v703, 2
        %v725 = vrot.slane %v704, 2
        %v726 = vsel %vm718, %v724, %v725
        %v727 = vrot.slane %v705, 2
        %v728 = vsel %vm718, %v725, %v727
        %v729 = vrot.slane %v706, 2
        %v730 = vrot.slane %v707, 2
        %v731 = vsel %vm718, %v729, %v730
        %v732 = vrot.slane %v708, 2
        %v733 = vsel %vm718, %v730, %v732
        %v740 = vadd.f32 %v663, %v721
        %v741 = vadd.f32 %v664, %v723
        %v742 = vadd.f32 %v665, %v726
        %v743 = vadd.f32 %v666, %v728
        %v744 = vadd.f32 %v667, %v731
        %v745 = vadd.f32 %v668, %v733
        %s746 = scalar_lea.vmem %s0, 21
        %v747 = vld [vmem:[%s746] sm:$0x1]
        %v748 = vld [vmem:[%s746 + $0x1] sm:$0x1]
        %v749 = vld [vmem:[%s746 + $0x2] sm:$0x1]
        %v753 = vlaneseq
        %v754 = vshrl.u32 %v753, 7
        %v755 = vsub.s32 0, %v754
        %v756 = vrot.slane %v747, %v755
        %v757 = vlaneseq
        %v758 = vshrl.u32 %v757, 7
        %v759 = vsub.s32 0, %v758
        %v760 = vrot.slane %v748, %v759
        %v761 = vlaneseq
        %v762 = vshrl.u32 %v761, 7
        %v763 = vsub.s32 0, %v762
        %v764 = vrot.slane %v749, %v763
        %765 = vset.pattern.permute.xlu0 0
        %766 = vperm.xlu0 %765, %v756
        %v767 = vpop.permute.xlu0 %766
        %769 = vset.pattern.permute.xlu0 0
        %770 = vperm.xlu0 %769, %v760
        %v771 = vpop.permute.xlu0 %770
        %773 = vset.pattern.permute.xlu0 0
        %774 = vperm.xlu0 %773, %v764
        %v775 = vpop.permute.xlu0 %774
        %v777 = vmul.f32 %v767, %v237
        %v778 = vmul.f32 %v767, %v238
        %v779 = vmul.f32 %v767, %v239
        %v780 = vmul.f32 %v771, %v240
        %v781 = vmul.f32 %v771, %v241
        %v782 = vmul.f32 %v771, %v242
        %v783 = vmul.f32 %v775, %v243
        %v784 = vmul.f32 %v775, %v244
        %v785 = vmul.f32 %v775, %v245
        %v795 = vrot.slane %v777, 2
        %v796 = vrot.slane %v778, 2
        %v797 = vsel %vm718, %v795, %v796
        %v798 = vrot.slane %v779, 2
        %v799 = vsel %vm718, %v796, %v798
        %v800 = vrot.slane %v780, 2
        %v801 = vrot.slane %v781, 2
        %v802 = vsel %vm718, %v800, %v801
        %v803 = vrot.slane %v782, 2
        %v804 = vsel %vm718, %v801, %v803
        %v805 = vrot.slane %v783, 2
        %v806 = vrot.slane %v784, 2
        %v807 = vsel %vm718, %v805, %v806
        %v808 = vrot.slane %v785, 2
        %v809 = vsel %vm718, %v806, %v808
        %810 = vrot.lane.b32.xlu0 %v797, 127
        %v811 = vpop.permute.xlu0 %810
        %812 = vrot.lane.b32.xlu0 %v799, 127
        %v813 = vpop.permute.xlu0 %812
        %814 = vrot.lane.b32.xlu0 %v802, 127
        %v815 = vpop.permute.xlu0 %814
        %816 = vrot.lane.b32.xlu0 %v804, 127
        %v817 = vpop.permute.xlu0 %816
        %818 = vrot.lane.b32.xlu0 %v807, 127
        %v819 = vpop.permute.xlu0 %818
        %820 = vrot.lane.b32.xlu0 %v809, 127
        %v821 = vpop.permute.xlu0 %820
        %v828 = vadd.f32 %v740, %v811
        %v829 = vadd.f32 %v741, %v813
        %v830 = vadd.f32 %v742, %v815
        %v831 = vadd.f32 %v743, %v817
        %v832 = vadd.f32 %v744, %v819
        %v833 = vadd.f32 %v745, %v821
        %s834 = scalar_lea.vmem %s0, 24
        %v835 = vld [vmem:[%s834] sm:$0x1]
        %v836 = vld [vmem:[%s834 + $0x1] sm:$0x1]
        %v837 = vld [vmem:[%s834 + $0x2] sm:$0x1]
        %v841 = vlaneseq
        %v842 = vshrl.u32 %v841, 7
        %v843 = vsub.s32 0, %v842
        %v844 = vrot.slane %v835, %v843
        %v845 = vlaneseq
        %v846 = vshrl.u32 %v845, 7
        %v847 = vsub.s32 0, %v846
        %v848 = vrot.slane %v836, %v847
        %v849 = vlaneseq
        %v850 = vshrl.u32 %v849, 7
        %v851 = vsub.s32 0, %v850
        %v852 = vrot.slane %v837, %v851
        %853 = vset.pattern.permute.xlu0 0
        %854 = vperm.xlu0 %853, %v844
        %v855 = vpop.permute.xlu0 %854
        %857 = vset.pattern.permute.xlu0 0
        %858 = vperm.xlu0 %857, %v848
        %v859 = vpop.permute.xlu0 %858
        %861 = vset.pattern.permute.xlu0 0
        %862 = vperm.xlu0 %861, %v852
        %v863 = vpop.permute.xlu0 %862
        %v865 = vmul.f32 %v855, %v237
        %v866 = vmul.f32 %v855, %v238
        %v867 = vmul.f32 %v855, %v239
        %v868 = vmul.f32 %v859, %v240
        %v869 = vmul.f32 %v859, %v241
        %v870 = vmul.f32 %v859, %v242
        %v871 = vmul.f32 %v863, %v243
        %v872 = vmul.f32 %v863, %v244
        %v873 = vmul.f32 %v863, %v245
        %v883 = vrot.slane %v865, 2
        %v884 = vrot.slane %v866, 2
        %v885 = vsel %vm718, %v883, %v884
        %v886 = vrot.slane %v867, 2
        %v887 = vsel %vm718, %v884, %v886
        %v888 = vrot.slane %v868, 2
        %v889 = vrot.slane %v869, 2
        %v890 = vsel %vm718, %v888, %v889
        %v891 = vrot.slane %v870, 2
        %v892 = vsel %vm718, %v889, %v891
        %v893 = vrot.slane %v871, 2
        %v894 = vrot.slane %v872, 2
        %v895 = vsel %vm718, %v893, %v894
        %v896 = vrot.slane %v873, 2
        %v897 = vsel %vm718, %v894, %v896
        %898 = vrot.lane.b32.xlu0 %v885, 126
        %v899 = vpop.permute.xlu0 %898
        %900 = vrot.lane.b32.xlu0 %v887, 126
        %v901 = vpop.permute.xlu0 %900
        %902 = vrot.lane.b32.xlu0 %v890, 126
        %v903 = vpop.permute.xlu0 %902
        %904 = vrot.lane.b32.xlu0 %v892, 126
        %v905 = vpop.permute.xlu0 %904
        %906 = vrot.lane.b32.xlu0 %v895, 126
        %v907 = vpop.permute.xlu0 %906
        %908 = vrot.lane.b32.xlu0 %v897, 126
        %v909 = vpop.permute.xlu0 %908
        %v916 = vadd.f32 %v828, %v899
        %v917 = vadd.f32 %v829, %v901
        %v918 = vadd.f32 %v830, %v903
        %v919 = vadd.f32 %v831, %v905
        %v920 = vadd.f32 %v832, %v907
        %v921 = vadd.f32 %v833, %v909
        %v922 = vld [vmem:[%s1] sm:$0x1]
        %v923 = vld [vmem:[%s1 + $0x1] sm:$0x1]
        %v924 = vld [vmem:[%s1 + $0x2] sm:$0x1]
        %v928 = vlaneseq
        %v929 = vshrl.u32 %v928, 7
        %v930 = vsub.s32 0, %v929
        %v931 = vrot.slane %v922, %v930
        %v932 = vlaneseq
        %v933 = vshrl.u32 %v932, 7
        %v934 = vsub.s32 0, %v933
        %v935 = vrot.slane %v923, %v934
        %v936 = vlaneseq
        %v937 = vshrl.u32 %v936, 7
        %v938 = vsub.s32 0, %v937
        %v939 = vrot.slane %v924, %v938
        %940 = vset.pattern.permute.xlu0 0
        %941 = vperm.xlu0 %940, %v931
        %v942 = vpop.permute.xlu0 %941
        %944 = vset.pattern.permute.xlu0 0
        %945 = vperm.xlu0 %944, %v935
        %v946 = vpop.permute.xlu0 %945
        %948 = vset.pattern.permute.xlu0 0
        %949 = vperm.xlu0 %948, %v939
        %v950 = vpop.permute.xlu0 %949
        %v952 = vadd.f32 %v916, %v942
        %v953 = vadd.f32 %v917, %v942
        %v954 = vadd.f32 %v918, %v946
        %v955 = vadd.f32 %v919, %v946
        %v956 = vadd.f32 %v920, %v950
        %v957 = vadd.f32 %v921, %v950
        %964 = vrot.lane.b32.xlu0 %v952, 1
        %v965 = vpop.permute.xlu0 %964
        %966 = vrot.lane.b32.xlu0 %v953, 1
        %v967 = vpop.permute.xlu0 %966
        %968 = vrot.lane.b32.xlu0 %v954, 1
        %v969 = vpop.permute.xlu0 %968
        %970 = vrot.lane.b32.xlu0 %v955, 1
        %v971 = vpop.permute.xlu0 %970
        %972 = vrot.lane.b32.xlu0 %v956, 1
        %v973 = vpop.permute.xlu0 %972
        %974 = vrot.lane.b32.xlu0 %v957, 1
        %v975 = vpop.permute.xlu0 %974
        %982 = vst.msk [vmem:[#allocation2 + $0x1] sm:$0xff] %vm230, %v965
        %983 = vst.msk [vmem:[#allocation2 + $0x9] sm:$0xff] %vm230, %v967
        %984 = vst.msk [vmem:[#allocation2 + $0x19] sm:$0xff] %vm230, %v969
        %985 = vst.msk [vmem:[#allocation2 + $0x21] sm:$0xff] %vm230, %v971
        %986 = vst.msk [vmem:[#allocation2 + $0x31] sm:$0xff] %vm230, %v973
        %987 = vst.msk [vmem:[#allocation2 + $0x39] sm:$0xff] %vm230, %v975
        %v988 = vld [vmem:[#allocation2] sm:$0xff]
        %v989 = vld [vmem:[#allocation2 + $0x8] sm:$0xff]
        %v990 = vld [vmem:[#allocation2 + $0x10] sm:$0x3]
        %v991 = vld [vmem:[#allocation2 + $0x18] sm:$0xff]
        %v992 = vld [vmem:[#allocation2 + $0x20] sm:$0xff]
        %v993 = vld [vmem:[#allocation2 + $0x28] sm:$0x3]
        %v994 = vld [vmem:[#allocation2 + $0x30] sm:$0xff]
        %v995 = vld [vmem:[#allocation2 + $0x38] sm:$0xff]
        %v996 = vld [vmem:[#allocation2 + $0x40] sm:$0x3]
        %s997 = scalar_lea.vmem %s0, 27
        %v998 = vld [vmem:[%s997] sm:$0x1]
        %v999 = vld [vmem:[%s997 + $0x1] sm:$0x1]
        %v1000 = vld [vmem:[%s997 + $0x2] sm:$0x1]
        %v1004 = vlaneseq
        %v1005 = vshrl.u32 %v1004, 7
        %v1006 = vsub.s32 0, %v1005
        %v1007 = vrot.slane %v998, %v1006
        %v1008 = vlaneseq
        %v1009 = vshrl.u32 %v1008, 7
        %v1010 = vsub.s32 0, %v1009
        %v1011 = vrot.slane %v999, %v1010
        %v1012 = vlaneseq
        %v1013 = vshrl.u32 %v1012, 7
        %v1014 = vsub.s32 0, %v1013
        %v1015 = vrot.slane %v1000, %v1014
        %1016 = vset.pattern.permute.xlu0 0
        %1017 = vperm.xlu0 %1016, %v1007
        %v1018 = vpop.permute.xlu0 %1017
        %1020 = vset.pattern.permute.xlu0 0
        %1021 = vperm.xlu0 %1020, %v1011
        %v1022 = vpop.permute.xlu0 %1021
        %1024 = vset.pattern.permute.xlu0 0
        %1025 = vperm.xlu0 %1024, %v1015
        %v1026 = vpop.permute.xlu0 %1025
        %v1028 = vmul.f32 %v1018, %v988
        %v1029 = vmul.f32 %v1018, %v989
        %v1030 = vmul.f32 %v1022, %v991
        %v1031 = vmul.f32 %v1022, %v992
        %v1032 = vmul.f32 %v1026, %v994
        %v1033 = vmul.f32 %v1026, %v995
        %s1034 = scalar_lea.vmem %s0, 30
        %v1035 = vld [vmem:[%s1034] sm:$0x1]
        %v1036 = vld [vmem:[%s1034 + $0x1] sm:$0x1]
        %v1037 = vld [vmem:[%s1034 + $0x2] sm:$0x1]
        %v1041 = vlaneseq
        %v1042 = vshrl.u32 %v1041, 7
        %v1043 = vsub.s32 0, %v1042
        %v1044 = vrot.slane %v1035, %v1043
        %v1045 = vlaneseq
        %v1046 = vshrl.u32 %v1045, 7
        %v1047 = vsub.s32 0, %v1046
        %v1048 = vrot.slane %v1036, %v1047
        %v1049 = vlaneseq
        %v1050 = vshrl.u32 %v1049, 7
        %v1051 = vsub.s32 0, %v1050
        %v1052 = vrot.slane %v1037, %v1051
        %1053 = vset.pattern.permute.xlu0 0
        %1054 = vperm.xlu0 %1053, %v1044
        %v1055 = vpop.permute.xlu0 %1054
        %1057 = vset.pattern.permute.xlu0 0
        %1058 = vperm.xlu0 %1057, %v1048
        %v1059 = vpop.permute.xlu0 %1058
        %1061 = vset.pattern.permute.xlu0 0
        %1062 = vperm.xlu0 %1061, %v1052
        %v1063 = vpop.permute.xlu0 %1062
        %v1065 = vmul.f32 %v1055, %v988
        %v1066 = vmul.f32 %v1055, %v989
        %v1067 = vmul.f32 %v1059, %v991
        %v1068 = vmul.f32 %v1059, %v992
        %v1069 = vmul.f32 %v1063, %v994
        %v1070 = vmul.f32 %v1063, %v995
        %1077 = vrot.lane.b32.xlu0 %v1065, 127
        %v1078 = vpop.permute.xlu0 %1077
        %1079 = vrot.lane.b32.xlu0 %v1066, 127
        %v1080 = vpop.permute.xlu0 %1079
        %1081 = vrot.lane.b32.xlu0 %v1067, 127
        %v1082 = vpop.permute.xlu0 %1081
        %1083 = vrot.lane.b32.xlu0 %v1068, 127
        %v1084 = vpop.permute.xlu0 %1083
        %1085 = vrot.lane.b32.xlu0 %v1069, 127
        %v1086 = vpop.permute.xlu0 %1085
        %1087 = vrot.lane.b32.xlu0 %v1070, 127
        %v1088 = vpop.permute.xlu0 %1087
        %v1095 = vadd.f32 %v1028, %v1078
        %v1096 = vadd.f32 %v1029, %v1080
        %v1097 = vadd.f32 %v1030, %v1082
        %v1098 = vadd.f32 %v1031, %v1084
        %v1099 = vadd.f32 %v1032, %v1086
        %v1100 = vadd.f32 %v1033, %v1088
        %s1101 = scalar_lea.vmem %s0, 33
        %v1102 = vld [vmem:[%s1101] sm:$0x1]
        %v1103 = vld [vmem:[%s1101 + $0x1] sm:$0x1]
        %v1104 = vld [vmem:[%s1101 + $0x2] sm:$0x1]
        %v1108 = vlaneseq
        %v1109 = vshrl.u32 %v1108, 7
        %v1110 = vsub.s32 0, %v1109
        %v1111 = vrot.slane %v1102, %v1110
        %v1112 = vlaneseq
        %v1113 = vshrl.u32 %v1112, 7
        %v1114 = vsub.s32 0, %v1113
        %v1115 = vrot.slane %v1103, %v1114
        %v1116 = vlaneseq
        %v1117 = vshrl.u32 %v1116, 7
        %v1118 = vsub.s32 0, %v1117
        %v1119 = vrot.slane %v1104, %v1118
        %1120 = vset.pattern.permute.xlu0 0
        %1121 = vperm.xlu0 %1120, %v1111
        %v1122 = vpop.permute.xlu0 %1121
        %1124 = vset.pattern.permute.xlu0 0
        %1125 = vperm.xlu0 %1124, %v1115
        %v1126 = vpop.permute.xlu0 %1125
        %1128 = vset.pattern.permute.xlu0 0
        %1129 = vperm.xlu0 %1128, %v1119
        %v1130 = vpop.permute.xlu0 %1129
        %v1132 = vmul.f32 %v1122, %v988
        %v1133 = vmul.f32 %v1122, %v989
        %v1134 = vmul.f32 %v1126, %v991
        %v1135 = vmul.f32 %v1126, %v992
        %v1136 = vmul.f32 %v1130, %v994
        %v1137 = vmul.f32 %v1130, %v995
        %1144 = vrot.lane.b32.xlu0 %v1132, 126
        %v1145 = vpop.permute.xlu0 %1144
        %1146 = vrot.lane.b32.xlu0 %v1133, 126
        %v1147 = vpop.permute.xlu0 %1146
        %1148 = vrot.lane.b32.xlu0 %v1134, 126
        %v1149 = vpop.permute.xlu0 %1148
        %1150 = vrot.lane.b32.xlu0 %v1135, 126
        %v1151 = vpop.permute.xlu0 %1150
        %1152 = vrot.lane.b32.xlu0 %v1136, 126
        %v1153 = vpop.permute.xlu0 %1152
        %1154 = vrot.lane.b32.xlu0 %v1137, 126
        %v1155 = vpop.permute.xlu0 %1154
        %v1162 = vadd.f32 %v1095, %v1145
        %v1163 = vadd.f32 %v1096, %v1147
        %v1164 = vadd.f32 %v1097, %v1149
        %v1165 = vadd.f32 %v1098, %v1151
        %v1166 = vadd.f32 %v1099, %v1153
        %v1167 = vadd.f32 %v1100, %v1155
        %s1168 = scalar_lea.vmem %s0, 36
        %v1169 = vld [vmem:[%s1168] sm:$0x1]
        %v1170 = vld [vmem:[%s1168 + $0x1] sm:$0x1]
        %v1171 = vld [vmem:[%s1168 + $0x2] sm:$0x1]
        %v1175 = vlaneseq
        %v1176 = vshrl.u32 %v1175, 7
        %v1177 = vsub.s32 0, %v1176
        %v1178 = vrot.slane %v1169, %v1177
        %v1179 = vlaneseq
        %v1180 = vshrl.u32 %v1179, 7
        %v1181 = vsub.s32 0, %v1180
        %v1182 = vrot.slane %v1170, %v1181
        %v1183 = vlaneseq
        %v1184 = vshrl.u32 %v1183, 7
        %v1185 = vsub.s32 0, %v1184
        %v1186 = vrot.slane %v1171, %v1185
        %1187 = vset.pattern.permute.xlu0 0
        %1188 = vperm.xlu0 %1187, %v1178
        %v1189 = vpop.permute.xlu0 %1188
        %1191 = vset.pattern.permute.xlu0 0
        %1192 = vperm.xlu0 %1191, %v1182
        %v1193 = vpop.permute.xlu0 %1192
        %1195 = vset.pattern.permute.xlu0 0
        %1196 = vperm.xlu0 %1195, %v1186
        %v1197 = vpop.permute.xlu0 %1196
        %v1199 = vmul.f32 %v1189, %v988
        %v1200 = vmul.f32 %v1189, %v989
        %v1201 = vmul.f32 %v1189, %v990
        %v1202 = vmul.f32 %v1193, %v991
        %v1203 = vmul.f32 %v1193, %v992
        %v1204 = vmul.f32 %v1193, %v993
        %v1205 = vmul.f32 %v1197, %v994
        %v1206 = vmul.f32 %v1197, %v995
        %v1207 = vmul.f32 %v1197, %v996
        %v1217 = vrot.slane %v1199, 1
        %v1218 = vrot.slane %v1200, 1
        %v1219 = vsel %vm465, %v1217, %v1218
        %v1220 = vrot.slane %v1201, 1
        %v1221 = vsel %vm465, %v1218, %v1220
        %v1222 = vrot.slane %v1202, 1
        %v1223 = vrot.slane %v1203, 1
        %v1224 = vsel %vm465, %v1222, %v1223
        %v1225 = vrot.slane %v1204, 1
        %v1226 = vsel %vm465, %v1223, %v1225
        %v1227 = vrot.slane %v1205, 1
        %v1228 = vrot.slane %v1206, 1
        %v1229 = vsel %vm465, %v1227, %v1228
        %v1230 = vrot.slane %v1207, 1
        %v1231 = vsel %vm465, %v1228, %v1230
        %v1238 = vadd.f32 %v1162, %v1219
        %v1239 = vadd.f32 %v1163, %v1221
        %v1240 = vadd.f32 %v1164, %v1224
        %v1241 = vadd.f32 %v1165, %v1226
        %v1242 = vadd.f32 %v1166, %v1229
        %v1243 = vadd.f32 %v1167, %v1231
        %s1244 = scalar_lea.vmem %s0, 39
        %v1245 = vld [vmem:[%s1244] sm:$0x1]
        %v1246 = vld [vmem:[%s1244 + $0x1] sm:$0x1]
        %v1247 = vld [vmem:[%s1244 + $0x2] sm:$0x1]
        %v1251 = vlaneseq
        %v1252 = vshrl.u32 %v1251, 7
        %v1253 = vsub.s32 0, %v1252
        %v1254 = vrot.slane %v1245, %v1253
        %v1255 = vlaneseq
        %v1256 = vshrl.u32 %v1255, 7
        %v1257 = vsub.s32 0, %v1256
        %v1258 = vrot.slane %v1246, %v1257
        %v1259 = vlaneseq
        %v1260 = vshrl.u32 %v1259, 7
        %v1261 = vsub.s32 0, %v1260
        %v1262 = vrot.slane %v1247, %v1261
        %1263 = vset.pattern.permute.xlu0 0
        %1264 = vperm.xlu0 %1263, %v1254
        %v1265 = vpop.permute.xlu0 %1264
        %1267 = vset.pattern.permute.xlu0 0
        %1268 = vperm.xlu0 %1267, %v1258
        %v1269 = vpop.permute.xlu0 %1268
        %1271 = vset.pattern.permute.xlu0 0
        %1272 = vperm.xlu0 %1271, %v1262
        %v1273 = vpop.permute.xlu0 %1272
        %v1275 = vmul.f32 %v1265, %v988
        %v1276 = vmul.f32 %v1265, %v989
        %v1277 = vmul.f32 %v1265, %v990
        %v1278 = vmul.f32 %v1269, %v991
        %v1279 = vmul.f32 %v1269, %v992
        %v1280 = vmul.f32 %v1269, %v993
        %v1281 = vmul.f32 %v1273, %v994
        %v1282 = vmul.f32 %v1273, %v995
        %v1283 = vmul.f32 %v1273, %v996
        %v1293 = vrot.slane %v1275, 1
        %v1294 = vrot.slane %v1276, 1
        %v1295 = vsel %vm465, %v1293, %v1294
        %v1296 = vrot.slane %v1277, 1
        %v1297 = vsel %vm465, %v1294, %v1296
        %v1298 = vrot.slane %v1278, 1
        %v1299 = vrot.slane %v1279, 1
        %v1300 = vsel %vm465, %v1298, %v1299
        %v1301 = vrot.slane %v1280, 1
        %v1302 = vsel %vm465, %v1299, %v1301
        %v1303 = vrot.slane %v1281, 1
        %v1304 = vrot.slane %v1282, 1
        %v1305 = vsel %vm465, %v1303, %v1304
        %v1306 = vrot.slane %v1283, 1
        %v1307 = vsel %vm465, %v1304, %v1306
        %1308 = vrot.lane.b32.xlu0 %v1295, 127
        %v1309 = vpop.permute.xlu0 %1308
        %1310 = vrot.lane.b32.xlu0 %v1297, 127
        %v1311 = vpop.permute.xlu0 %1310
        %1312 = vrot.lane.b32.xlu0 %v1300, 127
        %v1313 = vpop.permute.xlu0 %1312
        %1314 = vrot.lane.b32.xlu0 %v1302, 127
        %v1315 = vpop.permute.xlu0 %1314
        %1316 = vrot.lane.b32.xlu0 %v1305, 127
        %v1317 = vpop.permute.xlu0 %1316
        %1318 = vrot.lane.b32.xlu0 %v1307, 127
        %v1319 = vpop.permute.xlu0 %1318
        %v1326 = vadd.f32 %v1238, %v1309
        %v1327 = vadd.f32 %v1239, %v1311
        %v1328 = vadd.f32 %v1240, %v1313
        %v1329 = vadd.f32 %v1241, %v1315
        %v1330 = vadd.f32 %v1242, %v1317
        %v1331 = vadd.f32 %v1243, %v1319
        %s1332 = scalar_lea.vmem %s0, 42
        %v1333 = vld [vmem:[%s1332] sm:$0x1]
        %v1334 = vld [vmem:[%s1332 + $0x1] sm:$0x1]
        %v1335 = vld [vmem:[%s1332 + $0x2] sm:$0x1]
        %v1339 = vlaneseq
        %v1340 = vshrl.u32 %v1339, 7
        %v1341 = vsub.s32 0, %v1340
        %v1342 = vrot.slane %v1333, %v1341
        %v1343 = vlaneseq
        %v1344 = vshrl.u32 %v1343, 7
        %v1345 = vsub.s32 0, %v1344
        %v1346 = vrot.slane %v1334, %v1345
        %v1347 = vlaneseq
        %v1348 = vshrl.u32 %v1347, 7
        %v1349 = vsub.s32 0, %v1348
        %v1350 = vrot.slane %v1335, %v1349
        %1351 = vset.pattern.permute.xlu0 0
        %1352 = vperm.xlu0 %1351, %v1342
        %v1353 = vpop.permute.xlu0 %1352
        %1355 = vset.pattern.permute.xlu0 0
        %1356 = vperm.xlu0 %1355, %v1346
        %v1357 = vpop.permute.xlu0 %1356
        %1359 = vset.pattern.permute.xlu0 0
        %1360 = vperm.xlu0 %1359, %v1350
        %v1361 = vpop.permute.xlu0 %1360
        %v1363 = vmul.f32 %v1353, %v988
        %v1364 = vmul.f32 %v1353, %v989
        %v1365 = vmul.f32 %v1353, %v990
        %v1366 = vmul.f32 %v1357, %v991
        %v1367 = vmul.f32 %v1357, %v992
        %v1368 = vmul.f32 %v1357, %v993
        %v1369 = vmul.f32 %v1361, %v994
        %v1370 = vmul.f32 %v1361, %v995
        %v1371 = vmul.f32 %v1361, %v996
        %v1381 = vrot.slane %v1363, 1
        %v1382 = vrot.slane %v1364, 1
        %v1383 = vsel %vm465, %v1381, %v1382
        %v1384 = vrot.slane %v1365, 1
        %v1385 = vsel %vm465, %v1382, %v1384
        %v1386 = vrot.slane %v1366, 1
        %v1387 = vrot.slane %v1367, 1
        %v1388 = vsel %vm465, %v1386, %v1387
        %v1389 = vrot.slane %v1368, 1
        %v1390 = vsel %vm465, %v1387, %v1389
        %v1391 = vrot.slane %v1369, 1
        %v1392 = vrot.slane %v1370, 1
        %v1393 = vsel %vm465, %v1391, %v1392
        %v1394 = vrot.slane %v1371, 1
        %v1395 = vsel %vm465, %v1392, %v1394
        %1396 = vrot.lane.b32.xlu0 %v1383, 126
        %v1397 = vpop.permute.xlu0 %1396
        %1398 = vrot.lane.b32.xlu0 %v1385, 126
        %v1399 = vpop.permute.xlu0 %1398
        %1400 = vrot.lane.b32.xlu0 %v1388, 126
        %v1401 = vpop.permute.xlu0 %1400
        %1402 = vrot.lane.b32.xlu0 %v1390, 126
        %v1403 = vpop.permute.xlu0 %1402
        %1404 = vrot.lane.b32.xlu0 %v1393, 126
        %v1405 = vpop.permute.xlu0 %1404
        %1406 = vrot.lane.b32.xlu0 %v1395, 126
        %v1407 = vpop.permute.xlu0 %1406
        %v1414 = vadd.f32 %v1326, %v1397
        %v1415 = vadd.f32 %v1327, %v1399
        %v1416 = vadd.f32 %v1328, %v1401
        %v1417 = vadd.f32 %v1329, %v1403
        %v1418 = vadd.f32 %v1330, %v1405
        %v1419 = vadd.f32 %v1331, %v1407
        %s1420 = scalar_lea.vmem %s0, 45
        %v1421 = vld [vmem:[%s1420] sm:$0x1]
        %v1422 = vld [vmem:[%s1420 + $0x1] sm:$0x1]
        %v1423 = vld [vmem:[%s1420 + $0x2] sm:$0x1]
        %v1427 = vlaneseq
        %v1428 = vshrl.u32 %v1427, 7
        %v1429 = vsub.s32 0, %v1428
        %v1430 = vrot.slane %v1421, %v1429
        %v1431 = vlaneseq
        %v1432 = vshrl.u32 %v1431, 7
        %v1433 = vsub.s32 0, %v1432
        %v1434 = vrot.slane %v1422, %v1433
        %v1435 = vlaneseq
        %v1436 = vshrl.u32 %v1435, 7
        %v1437 = vsub.s32 0, %v1436
        %v1438 = vrot.slane %v1423, %v1437
        %1439 = vset.pattern.permute.xlu0 0
        %1440 = vperm.xlu0 %1439, %v1430
        %v1441 = vpop.permute.xlu0 %1440
        %1443 = vset.pattern.permute.xlu0 0
        %1444 = vperm.xlu0 %1443, %v1434
        %v1445 = vpop.permute.xlu0 %1444
        %1447 = vset.pattern.permute.xlu0 0
        %1448 = vperm.xlu0 %1447, %v1438
        %v1449 = vpop.permute.xlu0 %1448
        %v1451 = vmul.f32 %v1441, %v988
        %v1452 = vmul.f32 %v1441, %v989
        %v1453 = vmul.f32 %v1441, %v990
        %v1454 = vmul.f32 %v1445, %v991
        %v1455 = vmul.f32 %v1445, %v992
        %v1456 = vmul.f32 %v1445, %v993
        %v1457 = vmul.f32 %v1449, %v994
        %v1458 = vmul.f32 %v1449, %v995
        %v1459 = vmul.f32 %v1449, %v996
        %v1469 = vrot.slane %v1451, 2
        %v1470 = vrot.slane %v1452, 2
        %v1471 = vsel %vm718, %v1469, %v1470
        %v1472 = vrot.slane %v1453, 2
        %v1473 = vsel %vm718, %v1470, %v1472
        %v1474 = vrot.slane %v1454, 2
        %v1475 = vrot.slane %v1455, 2
        %v1476 = vsel %vm718, %v1474, %v1475
        %v1477 = vrot.slane %v1456, 2
        %v1478 = vsel %vm718, %v1475, %v1477
        %v1479 = vrot.slane %v1457, 2
        %v1480 = vrot.slane %v1458, 2
        %v1481 = vsel %vm718, %v1479, %v1480
        %v1482 = vrot.slane %v1459, 2
        %v1483 = vsel %vm718, %v1480, %v1482
        %v1490 = vadd.f32 %v1414, %v1471
        %v1491 = vadd.f32 %v1415, %v1473
        %v1492 = vadd.f32 %v1416, %v1476
        %v1493 = vadd.f32 %v1417, %v1478
        %v1494 = vadd.f32 %v1418, %v1481
        %v1495 = vadd.f32 %v1419, %v1483
        %s1496 = scalar_lea.vmem %s0, 48
        %v1497 = vld [vmem:[%s1496] sm:$0x1]
        %v1498 = vld [vmem:[%s1496 + $0x1] sm:$0x1]
        %v1499 = vld [vmem:[%s1496 + $0x2] sm:$0x1]
        %v1503 = vlaneseq
        %v1504 = vshrl.u32 %v1503, 7
        %v1505 = vsub.s32 0, %v1504
        %v1506 = vrot.slane %v1497, %v1505
        %v1507 = vlaneseq
        %v1508 = vshrl.u32 %v1507, 7
        %v1509 = vsub.s32 0, %v1508
        %v1510 = vrot.slane %v1498, %v1509
        %v1511 = vlaneseq
        %v1512 = vshrl.u32 %v1511, 7
        %v1513 = vsub.s32 0, %v1512
        %v1514 = vrot.slane %v1499, %v1513
        %1515 = vset.pattern.permute.xlu0 0
        %1516 = vperm.xlu0 %1515, %v1506
        %v1517 = vpop.permute.xlu0 %1516
        %1519 = vset.pattern.permute.xlu0 0
        %1520 = vperm.xlu0 %1519, %v1510
        %v1521 = vpop.permute.xlu0 %1520
        %1523 = vset.pattern.permute.xlu0 0
        %1524 = vperm.xlu0 %1523, %v1514
        %v1525 = vpop.permute.xlu0 %1524
        %v1527 = vmul.f32 %v1517, %v988
        %v1528 = vmul.f32 %v1517, %v989
        %v1529 = vmul.f32 %v1517, %v990
        %v1530 = vmul.f32 %v1521, %v991
        %v1531 = vmul.f32 %v1521, %v992
        %v1532 = vmul.f32 %v1521, %v993
        %v1533 = vmul.f32 %v1525, %v994
        %v1534 = vmul.f32 %v1525, %v995
        %v1535 = vmul.f32 %v1525, %v996
        %v1545 = vrot.slane %v1527, 2
        %v1546 = vrot.slane %v1528, 2
        %v1547 = vsel %vm718, %v1545, %v1546
        %v1548 = vrot.slane %v1529, 2
        %v1549 = vsel %vm718, %v1546, %v1548
        %v1550 = vrot.slane %v1530, 2
        %v1551 = vrot.slane %v1531, 2
        %v1552 = vsel %vm718, %v1550, %v1551
        %v1553 = vrot.slane %v1532, 2
        %v1554 = vsel %vm718, %v1551, %v1553
        %v1555 = vrot.slane %v1533, 2
        %v1556 = vrot.slane %v1534, 2
        %v1557 = vsel %vm718, %v1555, %v1556
        %v1558 = vrot.slane %v1535, 2
        %v1559 = vsel %vm718, %v1556, %v1558
        %1560 = vrot.lane.b32.xlu0 %v1547, 127
        %v1561 = vpop.permute.xlu0 %1560
        %1562 = vrot.lane.b32.xlu0 %v1549, 127
        %v1563 = vpop.permute.xlu0 %1562
        %1564 = vrot.lane.b32.xlu0 %v1552, 127
        %v1565 = vpop.permute.xlu0 %1564
        %1566 = vrot.lane.b32.xlu0 %v1554, 127
        %v1567 = vpop.permute.xlu0 %1566
        %1568 = vrot.lane.b32.xlu0 %v1557, 127
        %v1569 = vpop.permute.xlu0 %1568
        %1570 = vrot.lane.b32.xlu0 %v1559, 127
        %v1571 = vpop.permute.xlu0 %1570
        %v1578 = vadd.f32 %v1490, %v1561
        %v1579 = vadd.f32 %v1491, %v1563
        %v1580 = vadd.f32 %v1492, %v1565
        %v1581 = vadd.f32 %v1493, %v1567
        %v1582 = vadd.f32 %v1494, %v1569
        %v1583 = vadd.f32 %v1495, %v1571
        %s1584 = scalar_lea.vmem %s0, 51
        %v1585 = vld [vmem:[%s1584] sm:$0x1]
        %v1586 = vld [vmem:[%s1584 + $0x1] sm:$0x1]
        %v1587 = vld [vmem:[%s1584 + $0x2] sm:$0x1]
        %v1591 = vlaneseq
        %v1592 = vshrl.u32 %v1591, 7
        %v1593 = vsub.s32 0, %v1592
        %v1594 = vrot.slane %v1585, %v1593
        %v1595 = vlaneseq
        %v1596 = vshrl.u32 %v1595, 7
        %v1597 = vsub.s32 0, %v1596
        %v1598 = vrot.slane %v1586, %v1597
        %v1599 = vlaneseq
        %v1600 = vshrl.u32 %v1599, 7
        %v1601 = vsub.s32 0, %v1600
        %v1602 = vrot.slane %v1587, %v1601
        %1603 = vset.pattern.permute.xlu0 0
        %1604 = vperm.xlu0 %1603, %v1594
        %v1605 = vpop.permute.xlu0 %1604
        %1607 = vset.pattern.permute.xlu0 0
        %1608 = vperm.xlu0 %1607, %v1598
        %v1609 = vpop.permute.xlu0 %1608
        %1611 = vset.pattern.permute.xlu0 0
        %1612 = vperm.xlu0 %1611, %v1602
        %v1613 = vpop.permute.xlu0 %1612
        %v1615 = vmul.f32 %v1605, %v988
        %v1616 = vmul.f32 %v1605, %v989
        %v1617 = vmul.f32 %v1605, %v990
        %v1618 = vmul.f32 %v1609, %v991
        %v1619 = vmul.f32 %v1609, %v992
        %v1620 = vmul.f32 %v1609, %v993
        %v1621 = vmul.f32 %v1613, %v994
        %v1622 = vmul.f32 %v1613, %v995
        %v1623 = vmul.f32 %v1613, %v996
        %v1633 = vrot.slane %v1615, 2
        %v1634 = vrot.slane %v1616, 2
        %v1635 = vsel %vm718, %v1633, %v1634
        %v1636 = vrot.slane %v1617, 2
        %v1637 = vsel %vm718, %v1634, %v1636
        %v1638 = vrot.slane %v1618, 2
        %v1639 = vrot.slane %v1619, 2
        %v1640 = vsel %vm718, %v1638, %v1639
        %v1641 = vrot.slane %v1620, 2
        %v1642 = vsel %vm718, %v1639, %v1641
        %v1643 = vrot.slane %v1621, 2
        %v1644 = vrot.slane %v1622, 2
        %v1645 = vsel %vm718, %v1643, %v1644
        %v1646 = vrot.slane %v1623, 2
        %v1647 = vsel %vm718, %v1644, %v1646
        %1648 = vrot.lane.b32.xlu0 %v1635, 126
        %v1649 = vpop.permute.xlu0 %1648
        %1650 = vrot.lane.b32.xlu0 %v1637, 126
        %v1651 = vpop.permute.xlu0 %1650
        %1652 = vrot.lane.b32.xlu0 %v1640, 126
        %v1653 = vpop.permute.xlu0 %1652
        %1654 = vrot.lane.b32.xlu0 %v1642, 126
        %v1655 = vpop.permute.xlu0 %1654
        %1656 = vrot.lane.b32.xlu0 %v1645, 126
        %v1657 = vpop.permute.xlu0 %1656
        %1658 = vrot.lane.b32.xlu0 %v1647, 126
        %v1659 = vpop.permute.xlu0 %1658
        %v1666 = vadd.f32 %v1578, %v1649
        %v1667 = vadd.f32 %v1579, %v1651
        %v1668 = vadd.f32 %v1580, %v1653
        %v1669 = vadd.f32 %v1581, %v1655
        %v1670 = vadd.f32 %v1582, %v1657
        %v1671 = vadd.f32 %v1583, %v1659
        %s1672 = scalar_lea.vmem %s1, 3
        %v1673 = vld [vmem:[%s1672] sm:$0x1]
        %v1674 = vld [vmem:[%s1672 + $0x1] sm:$0x1]
        %v1675 = vld [vmem:[%s1672 + $0x2] sm:$0x1]
        %v1679 = vlaneseq
        %v1680 = vshrl.u32 %v1679, 7
        %v1681 = vsub.s32 0, %v1680
        %v1682 = vrot.slane %v1673, %v1681
        %v1683 = vlaneseq
        %v1684 = vshrl.u32 %v1683, 7
        %v1685 = vsub.s32 0, %v1684
        %v1686 = vrot.slane %v1674, %v1685
        %v1687 = vlaneseq
        %v1688 = vshrl.u32 %v1687, 7
        %v1689 = vsub.s32 0, %v1688
        %v1690 = vrot.slane %v1675, %v1689
        %1691 = vset.pattern.permute.xlu0 0
        %1692 = vperm.xlu0 %1691, %v1682
        %v1693 = vpop.permute.xlu0 %1692
        %1695 = vset.pattern.permute.xlu0 0
        %1696 = vperm.xlu0 %1695, %v1686
        %v1697 = vpop.permute.xlu0 %1696
        %1699 = vset.pattern.permute.xlu0 0
        %1700 = vperm.xlu0 %1699, %v1690
        %v1701 = vpop.permute.xlu0 %1700
        %v1703 = vadd.f32 %v1666, %v1693
        %v1704 = vadd.f32 %v1667, %v1693
        %v1705 = vadd.f32 %v1668, %v1697
        %v1706 = vadd.f32 %v1669, %v1697
        %v1707 = vadd.f32 %v1670, %v1701
        %v1708 = vadd.f32 %v1671, %v1701
        %vm1709 = vcmask 130048
        %1710 = vst.msk [vmem:[%s188] sm:$0xff] %vm1709, %v1703
        %1711 = vst.msk [vmem:[%s188 + $0x8] sm:$0xff] %vm1709, %v1704
        %1712 = vst.msk [vmem:[%s188 + $0x10] sm:$0xff] %vm1709, %v1705
        %1713 = vst.msk [vmem:[%s188 + $0x18] sm:$0xff] %vm1709, %v1706
        %1714 = vst.msk [vmem:[%s188 + $0x20] sm:$0xff] %vm1709, %v1707
        %1715 = vst.msk [vmem:[%s188 + $0x28] sm:$0xff] %vm1709, %v1708
        %s1716 = sand.u32 %s96, 1
        %s1717 = scalar_lea.sflag [#allocation5], %s1716
        %s1718 = sand.u32 %s96, 1
        %s1719 = smul.addr %s1718, 48
        %s1720 = scalar_lea.vmem [#allocation6], %s1719
        // Predicated region
        $region37: #{tpu_custom_call.1} parent=31 // pred_check
          %p1721 = pneg %p106
        $region38: #{tpu_custom_call.1} parent=31 // pred_check_branch
          %1723 = sbr.rel (%p1721) target = $region40
        $region39: #{tpu_custom_call.1} parent=31 // pred_region
          %s1725 = ssub.s32 768, 768
          %1726 = vsyncadd %s1717, %s1725
          %s1727 = smul.addr %s20, 6
          %s1728 = smul.addr %s1727, 128
          %s1729 = scalar_lea.hbm %s3, %s1728
          %s1730 = sshll.u32 %s1720, 4
          %s1731 = int_to_ptr.vmem [resolvable:$true] %s1730
          %1736 = dma.vmem_to_hbm [thread:$0]  %s1731, 768, %s1729, %s1717, 128, 128, 8
        $region40: #{tpu_custom_call.1} parent=31 // pred_fallthru
          _
      $region32: #{tpu_custom_call.1} parent=5 // pred_fallthru
        _
      %p1737 = scmp.le.s32.totalorder 2, %s15
      // Predicated region
      $region41: #{tpu_custom_call.1} parent=5 // pred_check
        %p1738 = pneg %p1737
      $region42: #{tpu_custom_call.1} parent=5 // pred_check_branch
        %1740 = sbr.rel (%p1738) target = $region44
      $region43: #{tpu_custom_call.1} parent=5 // pred_region
        %s1741 = ssub.s32 %s15, 2
        // Predicated region
        $region45: #{tpu_custom_call.1} parent=43 // pred_check
          %p1742 = pneg %p112
        $region46: #{tpu_custom_call.1} parent=43 // pred_check_branch
          %1744 = sbr.rel (%p1742) target = $region48
        $region47: #{tpu_custom_call.1} parent=43 // pred_region
          %s1745 = sand.u32 %s97, 1
          %s1746 = scalar_lea.sflag [#allocation5], %s1745
          %s1747 = sand.u32 %s97, 1
          %s1748 = smul.addr %s1747, 48
          %s1749 = scalar_lea.vmem [#allocation6], %s1748
          %1750 = dma.done %s1746, 768
        $region48: #{tpu_custom_call.1} parent=43 // pred_fallthru
          _
      $region44: #{tpu_custom_call.1} parent=5 // pred_fallthru
        _
    $region6: #{tpu_custom_call.1} parent=1 // loop_footer
      %s19 = sadd.s32 1, %s15
    $region7: #{tpu_custom_call.1} parent=1 // loop_footer_branch
      %14 = sbr.rel target = $region3
    $region8: #{tpu_custom_call.1} parent=1 // loop_exit
      _
    %1751 = vsyncpa [#allocation4], 1
    %s1752 = scalar_lea.sflag [#allocation4], 1
    %1753 = vsyncpa %s1752, 1
    %1754 = vsyncpa [#allocation5], 1
    %s1755 = scalar_lea.sflag [#allocation5], 1
    %1756 = vsyncpa %s1755, 1

</llo_original>
